<compile_context>
chip_gen: v7x
topology: tpu7x:2x2x1
jax: 0.10.0
libtpu: 0.0.40
codegen_flags: <defaults>
</compile_context>

<pallas_src>
import jax
import jax.numpy as jnp
from jax import lax
from jax.experimental import pallas as pl
from jax.experimental.pallas import tpu as pltpu


def _spatial_attention_kernel(x_ref, amax_ref, aavg_ref, ccol_ref, o_ref):
    # x_ref   : (c, h, w)  one batch slice of the input
    # amax_ref: (K, h, h)  row-shift matrices folded with W[:, 0] (max channel)
    # aavg_ref: (K, h, h)  row-shift matrices folded with W[:, 1] (avg channel)
    # ccol_ref: (K, w, w)  column-shift matrices
    # o_ref   : (c, h, w)
    c, h, w = x_ref.shape
    ksize = ccol_ref.shape[0]

    # --- channel pooling: one sweep computes max and sum (f32 accumulation) ---
    def pool_body(i, carry):
        m, s = carry
        xi = x_ref[i].astype(jnp.float32)          # (h, w)
        return jnp.maximum(m, xi), s + xi

    max_map, sum_map = lax.fori_loop(
        0, c, pool_body,
        (jnp.full((h, w), -jnp.inf, dtype=jnp.float32),
         jnp.zeros((h, w), dtype=jnp.float32)))
    mean_map = sum_map * (1.0 / c)

    # --- KxK conv (cross-correlation, zero padding, no bias) as matmuls ------
    # conv(maps)[y, x] = sum_dj [(amax[dj] @ max + aavg[dj] @ mean) @ ccol[dj]]
    acc = jnp.zeros((h, w), dtype=jnp.float32)
    for dj in range(ksize):
        row_mix = (
            jnp.dot(amax_ref[dj], max_map, preferred_element_type=jnp.float32)
            + jnp.dot(aavg_ref[dj], mean_map, preferred_element_type=jnp.float32))
        acc = acc + jnp.dot(row_mix, ccol_ref[dj],
                            preferred_element_type=jnp.float32)

    attn = jax.nn.sigmoid(acc)                      # (h, w), f32

    # --- broadcast scale in the input dtype (no full-tile f32 copy) ----------
    o_ref[...] = x_ref[...] * attn.astype(o_ref.dtype)[None, :, :]


def _shift_operators(conv_w, h, w):
    """Fold the (1, 2, K, K) conv weight into banded shift matrices.

    Returns (a_max, a_avg, c_col) with shapes (K, h, h), (K, h, h), (K, w, w)
    such that the zero-padded cross-correlation (exactly nn.Conv2d, bias=False)
    equals  sum_dj (a_max[dj] @ max_map + a_avg[dj] @ mean_map) @ c_col[dj].
    """
    wgt = jnp.asarray(conv_w, dtype=jnp.float32)
    if wgt.ndim == 4:                              # torch layout (1, 2, K, K)
        wgt = wgt[0]
    ksize = wgt.shape[-1]
    pad = ksize // 2

    off = jnp.arange(ksize)[:, None, None] - pad   # (K, 1, 1), tap offsets
    ridx = jnp.arange(h)
    cidx = jnp.arange(w)
    # (row_shift[di] @ m)[a, x] = m[a + di - pad, x], zero outside [0, h).
    row_shift = (ridx[None, None, :] == ridx[None, :, None] + off
                 ).astype(jnp.float32)             # (K, h, h)
    # (m @ c_col[dj])[y, x] = m[y, x + dj - pad], zero outside [0, w).
    c_col = (cidx[None, :, None] == cidx[None, None, :] + off
             ).astype(jnp.float32)                 # (K, w, w)

    a_max = jnp.einsum("ij,iab->jab", wgt[0], row_shift)   # fold weights over di
    a_avg = jnp.einsum("ij,iab->jab", wgt[1], row_shift)
    return a_max, a_avg, c_col


def spatial_attention(x, conv_w):
    """x: (b, c, h, w) NCHW; conv_w: (1, 2, K, K) Conv2d weight (no bias)."""
    b, c, h, w = x.shape
    a_max, a_avg, c_col = _shift_operators(conv_w, h, w)
    ksize = c_col.shape[0]

    # Explicit VMEM budget: double-buffered in/out batch tiles + conv operators.
    tile_bytes = c * h * w * x.dtype.itemsize
    const_bytes = (2 * ksize * h * h + ksize * w * w) * 4
    vmem_limit = int(min(max(4 * tile_bytes + 2 * const_bytes + (4 << 20),
                             16 << 20), 64 << 20))

    return pl.pallas_call(
        _spatial_attention_kernel,
        out_shape=jax.ShapeDtypeStruct((b, c, h, w), x.dtype),
        grid=(b,),
        in_specs=[
            pl.BlockSpec((None, c, h, w), lambda i: (i, 0, 0, 0)),  # x slice
            pl.BlockSpec((ksize, h, h), lambda i: (0, 0, 0)),       # a_max
            pl.BlockSpec((ksize, h, h), lambda i: (0, 0, 0)),       # a_avg
            pl.BlockSpec((ksize, w, w), lambda i: (0, 0, 0)),       # c_col
        ],
        out_specs=pl.BlockSpec((None, c, h, w), lambda i: (i, 0, 0, 0)),
        input_output_aliases={0: 0},
        compiler_params=pltpu.CompilerParams(
            dimension_semantics=("parallel",),
            vmem_limit_bytes=vmem_limit),
    )(x, a_max, a_avg, c_col)


def _reference(x, conv_w):
    # Pure-JAX reference mirroring the PyTorch forward.
    max_map = jnp.max(x, axis=1, keepdims=True)
    avg_map = jnp.mean(x, axis=1, keepdims=True)
    stacked = jnp.concatenate([max_map, avg_map], axis=1)        # (b, 2, h, w)
    pad = conv_w.shape[-1] // 2
    y = lax.conv_general_dilated(
        stacked, jnp.asarray(conv_w, jnp.float32),
        window_strides=(1, 1), padding=((pad, pad), (pad, pad)),
        dimension_numbers=("NCHW", "OIHW", "NCHW"))
    return x * jax.nn.sigmoid(y)


if __name__ == "__main__":
    b, c, h, w = 2, 8, 16, 16
    ksize = 7

    key = jax.random.PRNGKey(0)
    key_x, key_w = jax.random.split(key)
    x = jax.random.normal(key_x, (b, c, h, w), dtype=jnp.float32)
    # torch Conv2d(2, 1, kernel_size=7, padding=3, bias=False) weight layout.
    conv_w = jax.random.normal(key_w, (1, 2, ksize, ksize), dtype=jnp.float32) * 0.1

    ref = _reference(x, conv_w)          # compute before the (aliased) kernel call
    out = spatial_attention(x, conv_w)
    out = jax.block_until_ready(out)

    assert out.shape == (b, c, h, w)
    assert jnp.allclose(out, ref, atol=1e-4, rtol=1e-4), "mismatch vs reference"
    print("KERNEL_OK")
</pallas_src>

<mosaic_0001>
module attributes {stable_mosaic.version = 11 : i64} {
  func.func @_spatial_attention_kernel(%arg0: i32, %arg1: memref<1x8x16x16xf32, #tpu.memory_space<vmem>>, %arg2: memref<7x16x16xf32, #tpu.memory_space<vmem>>, %arg3: memref<7x16x16xf32, #tpu.memory_space<vmem>>, %arg4: memref<7x16x16xf32, #tpu.memory_space<vmem>>, %arg5: memref<1x8x16x16xf32, #tpu.memory_space<vmem>>) attributes {dimension_semantics = [#tpu.dimension_semantics<parallel>], iteration_bounds = array<i64: 2>, scalar_prefetch = 0 : i64, scratch_operands = 0 : i64, tpu.core_type = #tpu.core_type<tc>, window_params = [{transform_indices = @transform_0, window_bounds = array<i64: 1, 8, 16, 16>}, {pipeline_mode = #tpu.pipeline_mode<synchronous>, transform_indices = @transform_1, window_bounds = array<i64: 7, 16, 16>}, {pipeline_mode = #tpu.pipeline_mode<synchronous>, transform_indices = @transform_2, window_bounds = array<i64: 7, 16, 16>}, {pipeline_mode = #tpu.pipeline_mode<synchronous>, transform_indices = @transform_3, window_bounds = array<i64: 7, 16, 16>}, {transform_indices = @transform_4, window_bounds = array<i64: 1, 8, 16, 16>}]} {
    %cst = arith.constant 0xFF800000 : f32
    %0 = vector.broadcast %cst : f32 to vector<16x16xf32>
    %cst_0 = arith.constant 0.000000e+00 : f32
    %1 = vector.broadcast %cst_0 : f32 to vector<16x16xf32>
    %c0_i32 = arith.constant 0 : i32
    %c8_i32 = arith.constant 8 : i32
    %2 = arith.addi %c0_i32, %c8_i32 : i32
    %c1_i32 = arith.constant 1 : i32
    %3:2 = scf.for %arg6 = %c0_i32 to %2 step %c1_i32 iter_args(%arg7 = %0, %arg8 = %1) -> (vector<16x16xf32>, vector<16x16xf32>)  : i32 {
      %c0_90 = arith.constant 0 : index
      %97 = arith.index_cast %arg6 : i32 to index
      %c0_91 = arith.constant 0 : index
      %c0_92 = arith.constant 0 : index
      %98 = vector.load %arg1[%c0_90, %97, %c0_91, %c0_92] : memref<1x8x16x16xf32, #tpu.memory_space<vmem>>, vector<1x1x16x16xf32>
      %99 = vector.shape_cast %98 : vector<1x1x16x16xf32> to vector<16x16xf32>
      %100 = arith.maximumf %arg7, %99 : vector<16x16xf32>
      %101 = arith.addf %arg8, %99 : vector<16x16xf32>
      scf.yield %100, %101 : vector<16x16xf32>, vector<16x16xf32>
    }
    %c8_i32_1 = arith.constant 8 : i32
    %cst_2 = arith.constant 1.250000e-01 : f32
    %4 = vector.broadcast %cst_2 : f32 to vector<16x16xf32>
    %5 = arith.mulf %3#1, %4 : vector<16x16xf32>
    %cst_3 = arith.constant 0.000000e+00 : f32
    %6 = vector.broadcast %cst_3 : f32 to vector<16x16xf32>
    %c0 = arith.constant 0 : index
    %c0_4 = arith.constant 0 : index
    %c0_5 = arith.constant 0 : index
    %7 = vector.load %arg2[%c0, %c0_4, %c0_5] : memref<7x16x16xf32, #tpu.memory_space<vmem>>, vector<1x16x16xf32>
    %8 = vector.shape_cast %7 : vector<1x16x16xf32> to vector<16x16xf32>
    %cst_6 = arith.constant dense<0.000000e+00> : vector<16x16xf32>
    %9 = tpu.matmul %8, %3#0, %cst_6 {dimension_numbers = #tpu.dot_dimension_numbers<[1], [0], [0], [1], [0, 0, 1, 1], [], []>} : vector<16x16xf32>, vector<16x16xf32>, vector<16x16xf32> -> vector<16x16xf32>
    %c0_7 = arith.constant 0 : index
    %c0_8 = arith.constant 0 : index
    %c0_9 = arith.constant 0 : index
    %10 = vector.load %arg3[%c0_7, %c0_8, %c0_9] : memref<7x16x16xf32, #tpu.memory_space<vmem>>, vector<1x16x16xf32>
    %11 = vector.shape_cast %10 : vector<1x16x16xf32> to vector<16x16xf32>
    %cst_10 = arith.constant dense<0.000000e+00> : vector<16x16xf32>
    %12 = tpu.matmul %11, %5, %cst_10 {dimension_numbers = #tpu.dot_dimension_numbers<[1], [0], [0], [1], [0, 0, 1, 1], [], []>} : vector<16x16xf32>, vector<16x16xf32>, vector<16x16xf32> -> vector<16x16xf32>
    %13 = arith.addf %9, %12 : vector<16x16xf32>
    %c0_11 = arith.constant 0 : index
    %c0_12 = arith.constant 0 : index
    %c0_13 = arith.constant 0 : index
    %14 = vector.load %arg4[%c0_11, %c0_12, %c0_13] : memref<7x16x16xf32, #tpu.memory_space<vmem>>, vector<1x16x16xf32>
    %15 = vector.shape_cast %14 : vector<1x16x16xf32> to vector<16x16xf32>
    %cst_14 = arith.constant dense<0.000000e+00> : vector<16x16xf32>
    %16 = tpu.matmul %13, %15, %cst_14 {dimension_numbers = #tpu.dot_dimension_numbers<[1], [0], [0], [1], [0, 0, 1, 1], [], []>} : vector<16x16xf32>, vector<16x16xf32>, vector<16x16xf32> -> vector<16x16xf32>
    %17 = arith.addf %6, %16 : vector<16x16xf32>
    %c1 = arith.constant 1 : index
    %c0_15 = arith.constant 0 : index
    %c0_16 = arith.constant 0 : index
    %18 = vector.load %arg2[%c1, %c0_15, %c0_16] : memref<7x16x16xf32, #tpu.memory_space<vmem>>, vector<1x16x16xf32>
    %19 = vector.shape_cast %18 : vector<1x16x16xf32> to vector<16x16xf32>
    %cst_17 = arith.constant dense<0.000000e+00> : vector<16x16xf32>
    %20 = tpu.matmul %19, %3#0, %cst_17 {dimension_numbers = #tpu.dot_dimension_numbers<[1], [0], [0], [1], [0, 0, 1, 1], [], []>} : vector<16x16xf32>, vector<16x16xf32>, vector<16x16xf32> -> vector<16x16xf32>
    %c1_18 = arith.constant 1 : index
    %c0_19 = arith.constant 0 : index
    %c0_20 = arith.constant 0 : index
    %21 = vector.load %arg3[%c1_18, %c0_19, %c0_20] : memref<7x16x16xf32, #tpu.memory_space<vmem>>, vector<1x16x16xf32>
    %22 = vector.shape_cast %21 : vector<1x16x16xf32> to vector<16x16xf32>
    %cst_21 = arith.constant dense<0.000000e+00> : vector<16x16xf32>
    %23 = tpu.matmul %22, %5, %cst_21 {dimension_numbers = #tpu.dot_dimension_numbers<[1], [0], [0], [1], [0, 0, 1, 1], [], []>} : vector<16x16xf32>, vector<16x16xf32>, vector<16x16xf32> -> vector<16x16xf32>
    %24 = arith.addf %20, %23 : vector<16x16xf32>
    %c1_22 = arith.constant 1 : index
    %c0_23 = arith.constant 0 : index
    %c0_24 = arith.constant 0 : index
    %25 = vector.load %arg4[%c1_22, %c0_23, %c0_24] : memref<7x16x16xf32, #tpu.memory_space<vmem>>, vector<1x16x16xf32>
    %26 = vector.shape_cast %25 : vector<1x16x16xf32> to vector<16x16xf32>
    %cst_25 = arith.constant dense<0.000000e+00> : vector<16x16xf32>
    %27 = tpu.matmul %24, %26, %cst_25 {dimension_numbers = #tpu.dot_dimension_numbers<[1], [0], [0], [1], [0, 0, 1, 1], [], []>} : vector<16x16xf32>, vector<16x16xf32>, vector<16x16xf32> -> vector<16x16xf32>
    %28 = arith.addf %17, %27 : vector<16x16xf32>
    %c2 = arith.constant 2 : index
    %c0_26 = arith.constant 0 : index
    %c0_27 = arith.constant 0 : index
    %29 = vector.load %arg2[%c2, %c0_26, %c0_27] : memref<7x16x16xf32, #tpu.memory_space<vmem>>, vector<1x16x16xf32>
    %30 = vector.shape_cast %29 : vector<1x16x16xf32> to vector<16x16xf32>
    %cst_28 = arith.constant dense<0.000000e+00> : vector<16x16xf32>
    %31 = tpu.matmul %30, %3#0, %cst_28 {dimension_numbers = #tpu.dot_dimension_numbers<[1], [0], [0], [1], [0, 0, 1, 1], [], []>} : vector<16x16xf32>, vector<16x16xf32>, vector<16x16xf32> -> vector<16x16xf32>
    %c2_29 = arith.constant 2 : index
    %c0_30 = arith.constant 0 : index
    %c0_31 = arith.constant 0 : index
    %32 = vector.load %arg3[%c2_29, %c0_30, %c0_31] : memref<7x16x16xf32, #tpu.memory_space<vmem>>, vector<1x16x16xf32>
    %33 = vector.shape_cast %32 : vector<1x16x16xf32> to vector<16x16xf32>
    %cst_32 = arith.constant dense<0.000000e+00> : vector<16x16xf32>
    %34 = tpu.matmul %33, %5, %cst_32 {dimension_numbers = #tpu.dot_dimension_numbers<[1], [0], [0], [1], [0, 0, 1, 1], [], []>} : vector<16x16xf32>, vector<16x16xf32>, vector<16x16xf32> -> vector<16x16xf32>
    %35 = arith.addf %31, %34 : vector<16x16xf32>
    %c2_33 = arith.constant 2 : index
    %c0_34 = arith.constant 0 : index
    %c0_35 = arith.constant 0 : index
    %36 = vector.load %arg4[%c2_33, %c0_34, %c0_35] : memref<7x16x16xf32, #tpu.memory_space<vmem>>, vector<1x16x16xf32>
    %37 = vector.shape_cast %36 : vector<1x16x16xf32> to vector<16x16xf32>
    %cst_36 = arith.constant dense<0.000000e+00> : vector<16x16xf32>
    %38 = tpu.matmul %35, %37, %cst_36 {dimension_numbers = #tpu.dot_dimension_numbers<[1], [0], [0], [1], [0, 0, 1, 1], [], []>} : vector<16x16xf32>, vector<16x16xf32>, vector<16x16xf32> -> vector<16x16xf32>
    %39 = arith.addf %28, %38 : vector<16x16xf32>
    %c3 = arith.constant 3 : index
    %c0_37 = arith.constant 0 : index
    %c0_38 = arith.constant 0 : index
    %40 = vector.load %arg2[%c3, %c0_37, %c0_38] : memref<7x16x16xf32, #tpu.memory_space<vmem>>, vector<1x16x16xf32>
    %41 = vector.shape_cast %40 : vector<1x16x16xf32> to vector<16x16xf32>
    %cst_39 = arith.constant dense<0.000000e+00> : vector<16x16xf32>
    %42 = tpu.matmul %41, %3#0, %cst_39 {dimension_numbers = #tpu.dot_dimension_numbers<[1], [0], [0], [1], [0, 0, 1, 1], [], []>} : vector<16x16xf32>, vector<16x16xf32>, vector<16x16xf32> -> vector<16x16xf32>
    %c3_40 = arith.constant 3 : index
    %c0_41 = arith.constant 0 : index
    %c0_42 = arith.constant 0 : index
    %43 = vector.load %arg3[%c3_40, %c0_41, %c0_42] : memref<7x16x16xf32, #tpu.memory_space<vmem>>, vector<1x16x16xf32>
    %44 = vector.shape_cast %43 : vector<1x16x16xf32> to vector<16x16xf32>
    %cst_43 = arith.constant dense<0.000000e+00> : vector<16x16xf32>
    %45 = tpu.matmul %44, %5, %cst_43 {dimension_numbers = #tpu.dot_dimension_numbers<[1], [0], [0], [1], [0, 0, 1, 1], [], []>} : vector<16x16xf32>, vector<16x16xf32>, vector<16x16xf32> -> vector<16x16xf32>
    %46 = arith.addf %42, %45 : vector<16x16xf32>
    %c3_44 = arith.constant 3 : index
    %c0_45 = arith.constant 0 : index
    %c0_46 = arith.constant 0 : index
    %47 = vector.load %arg4[%c3_44, %c0_45, %c0_46] : memref<7x16x16xf32, #tpu.memory_space<vmem>>, vector<1x16x16xf32>
    %48 = vector.shape_cast %47 : vector<1x16x16xf32> to vector<16x16xf32>
    %cst_47 = arith.constant dense<0.000000e+00> : vector<16x16xf32>
    %49 = tpu.matmul %46, %48, %cst_47 {dimension_numbers = #tpu.dot_dimension_numbers<[1], [0], [0], [1], [0, 0, 1, 1], [], []>} : vector<16x16xf32>, vector<16x16xf32>, vector<16x16xf32> -> vector<16x16xf32>
    %50 = arith.addf %39, %49 : vector<16x16xf32>
    %c4 = arith.constant 4 : index
    %c0_48 = arith.constant 0 : index
    %c0_49 = arith.constant 0 : index
    %51 = vector.load %arg2[%c4, %c0_48, %c0_49] : memref<7x16x16xf32, #tpu.memory_space<vmem>>, vector<1x16x16xf32>
    %52 = vector.shape_cast %51 : vector<1x16x16xf32> to vector<16x16xf32>
    %cst_50 = arith.constant dense<0.000000e+00> : vector<16x16xf32>
    %53 = tpu.matmul %52, %3#0, %cst_50 {dimension_numbers = #tpu.dot_dimension_numbers<[1], [0], [0], [1], [0, 0, 1, 1], [], []>} : vector<16x16xf32>, vector<16x16xf32>, vector<16x16xf32> -> vector<16x16xf32>
    %c4_51 = arith.constant 4 : index
    %c0_52 = arith.constant 0 : index
    %c0_53 = arith.constant 0 : index
    %54 = vector.load %arg3[%c4_51, %c0_52, %c0_53] : memref<7x16x16xf32, #tpu.memory_space<vmem>>, vector<1x16x16xf32>
    %55 = vector.shape_cast %54 : vector<1x16x16xf32> to vector<16x16xf32>
    %cst_54 = arith.constant dense<0.000000e+00> : vector<16x16xf32>
    %56 = tpu.matmul %55, %5, %cst_54 {dimension_numbers = #tpu.dot_dimension_numbers<[1], [0], [0], [1], [0, 0, 1, 1], [], []>} : vector<16x16xf32>, vector<16x16xf32>, vector<16x16xf32> -> vector<16x16xf32>
    %57 = arith.addf %53, %56 : vector<16x16xf32>
    %c4_55 = arith.constant 4 : index
    %c0_56 = arith.constant 0 : index
    %c0_57 = arith.constant 0 : index
    %58 = vector.load %arg4[%c4_55, %c0_56, %c0_57] : memref<7x16x16xf32, #tpu.memory_space<vmem>>, vector<1x16x16xf32>
    %59 = vector.shape_cast %58 : vector<1x16x16xf32> to vector<16x16xf32>
    %cst_58 = arith.constant dense<0.000000e+00> : vector<16x16xf32>
    %60 = tpu.matmul %57, %59, %cst_58 {dimension_numbers = #tpu.dot_dimension_numbers<[1], [0], [0], [1], [0, 0, 1, 1], [], []>} : vector<16x16xf32>, vector<16x16xf32>, vector<16x16xf32> -> vector<16x16xf32>
    %61 = arith.addf %50, %60 : vector<16x16xf32>
    %c5 = arith.constant 5 : index
    %c0_59 = arith.constant 0 : index
    %c0_60 = arith.constant 0 : index
    %62 = vector.load %arg2[%c5, %c0_59, %c0_60] : memref<7x16x16xf32, #tpu.memory_space<vmem>>, vector<1x16x16xf32>
    %63 = vector.shape_cast %62 : vector<1x16x16xf32> to vector<16x16xf32>
    %cst_61 = arith.constant dense<0.000000e+00> : vector<16x16xf32>
    %64 = tpu.matmul %63, %3#0, %cst_61 {dimension_numbers = #tpu.dot_dimension_numbers<[1], [0], [0], [1], [0, 0, 1, 1], [], []>} : vector<16x16xf32>, vector<16x16xf32>, vector<16x16xf32> -> vector<16x16xf32>
    %c5_62 = arith.constant 5 : index
    %c0_63 = arith.constant 0 : index
    %c0_64 = arith.constant 0 : index
    %65 = vector.load %arg3[%c5_62, %c0_63, %c0_64] : memref<7x16x16xf32, #tpu.memory_space<vmem>>, vector<1x16x16xf32>
    %66 = vector.shape_cast %65 : vector<1x16x16xf32> to vector<16x16xf32>
    %cst_65 = arith.constant dense<0.000000e+00> : vector<16x16xf32>
    %67 = tpu.matmul %66, %5, %cst_65 {dimension_numbers = #tpu.dot_dimension_numbers<[1], [0], [0], [1], [0, 0, 1, 1], [], []>} : vector<16x16xf32>, vector<16x16xf32>, vector<16x16xf32> -> vector<16x16xf32>
    %68 = arith.addf %64, %67 : vector<16x16xf32>
    %c5_66 = arith.constant 5 : index
    %c0_67 = arith.constant 0 : index
    %c0_68 = arith.constant 0 : index
    %69 = vector.load %arg4[%c5_66, %c0_67, %c0_68] : memref<7x16x16xf32, #tpu.memory_space<vmem>>, vector<1x16x16xf32>
    %70 = vector.shape_cast %69 : vector<1x16x16xf32> to vector<16x16xf32>
    %cst_69 = arith.constant dense<0.000000e+00> : vector<16x16xf32>
    %71 = tpu.matmul %68, %70, %cst_69 {dimension_numbers = #tpu.dot_dimension_numbers<[1], [0], [0], [1], [0, 0, 1, 1], [], []>} : vector<16x16xf32>, vector<16x16xf32>, vector<16x16xf32> -> vector<16x16xf32>
    %72 = arith.addf %61, %71 : vector<16x16xf32>
    %c6 = arith.constant 6 : index
    %c0_70 = arith.constant 0 : index
    %c0_71 = arith.constant 0 : index
    %73 = vector.load %arg2[%c6, %c0_70, %c0_71] : memref<7x16x16xf32, #tpu.memory_space<vmem>>, vector<1x16x16xf32>
    %74 = vector.shape_cast %73 : vector<1x16x16xf32> to vector<16x16xf32>
    %cst_72 = arith.constant dense<0.000000e+00> : vector<16x16xf32>
    %75 = tpu.matmul %74, %3#0, %cst_72 {dimension_numbers = #tpu.dot_dimension_numbers<[1], [0], [0], [1], [0, 0, 1, 1], [], []>} : vector<16x16xf32>, vector<16x16xf32>, vector<16x16xf32> -> vector<16x16xf32>
    %c6_73 = arith.constant 6 : index
    %c0_74 = arith.constant 0 : index
    %c0_75 = arith.constant 0 : index
    %76 = vector.load %arg3[%c6_73, %c0_74, %c0_75] : memref<7x16x16xf32, #tpu.memory_space<vmem>>, vector<1x16x16xf32>
    %77 = vector.shape_cast %76 : vector<1x16x16xf32> to vector<16x16xf32>
    %cst_76 = arith.constant dense<0.000000e+00> : vector<16x16xf32>
    %78 = tpu.matmul %77, %5, %cst_76 {dimension_numbers = #tpu.dot_dimension_numbers<[1], [0], [0], [1], [0, 0, 1, 1], [], []>} : vector<16x16xf32>, vector<16x16xf32>, vector<16x16xf32> -> vector<16x16xf32>
    %79 = arith.addf %75, %78 : vector<16x16xf32>
    %c6_77 = arith.constant 6 : index
    %c0_78 = arith.constant 0 : index
    %c0_79 = arith.constant 0 : index
    %80 = vector.load %arg4[%c6_77, %c0_78, %c0_79] : memref<7x16x16xf32, #tpu.memory_space<vmem>>, vector<1x16x16xf32>
    %81 = vector.shape_cast %80 : vector<1x16x16xf32> to vector<16x16xf32>
    %cst_80 = arith.constant dense<0.000000e+00> : vector<16x16xf32>
    %82 = tpu.matmul %79, %81, %cst_80 {dimension_numbers = #tpu.dot_dimension_numbers<[1], [0], [0], [1], [0, 0, 1, 1], [], []>} : vector<16x16xf32>, vector<16x16xf32>, vector<16x16xf32> -> vector<16x16xf32>
    %83 = arith.addf %72, %82 : vector<16x16xf32>
    %84 = arith.negf %83 : vector<16x16xf32>
    %85 = math.exp %84 : vector<16x16xf32>
    %cst_81 = arith.constant 1.000000e+00 : f32
    %86 = vector.broadcast %cst_81 : f32 to vector<16x16xf32>
    %87 = arith.addf %86, %85 : vector<16x16xf32>
    %88 = arith.divf %86, %87 : vector<16x16xf32>
    %c0_82 = arith.constant 0 : index
    %c0_83 = arith.constant 0 : index
    %c0_84 = arith.constant 0 : index
    %c0_85 = arith.constant 0 : index
    %89 = vector.load %arg1[%c0_82, %c0_83, %c0_84, %c0_85] : memref<1x8x16x16xf32, #tpu.memory_space<vmem>>, vector<1x8x16x16xf32>
    %90 = vector.shape_cast %89 : vector<1x8x16x16xf32> to vector<8x16x16xf32>
    %91 = vector.shape_cast %88 : vector<16x16xf32> to vector<1x16x16xf32>
    %92 = vector.broadcast %91 : vector<1x16x16xf32> to vector<8x16x16xf32>
    %93 = arith.mulf %90, %92 : vector<8x16x16xf32>
    %c0_86 = arith.constant 0 : index
    %c0_87 = arith.constant 0 : index
    %c0_88 = arith.constant 0 : index
    %c0_89 = arith.constant 0 : index
    %94 = vector.load %arg5[%c0_86, %c0_87, %c0_88, %c0_89] : memref<1x8x16x16xf32, #tpu.memory_space<vmem>>, vector<1x8x16x16xf32>
    %95 = vector.shape_cast %94 : vector<1x8x16x16xf32> to vector<8x16x16xf32>
    %96 = vector.shape_cast %93 : vector<8x16x16xf32> to vector<1x8x16x16xf32>
    tpu.vector_store %arg5[%c0_86, %c0_87, %c0_88, %c0_89], %96 {strides = array<i32>} : memref<1x8x16x16xf32, #tpu.memory_space<vmem>>, vector<1x8x16x16xf32>,
    return
  }
  func.func @transform_0(%arg0: i32) -> (i32, i32, i32, i32) {
    %c0_i32 = arith.constant 0 : i32
    %c0_i32_0 = arith.constant 0 : i32
    %c0_i32_1 = arith.constant 0 : i32
    %c0_i32_2 = arith.constant 0 : i32
    return %arg0, %c0_i32, %c0_i32_0, %c0_i32_1 : i32, i32, i32, i32
  }
  func.func @transform_1(%arg0: i32) -> (i32, i32, i32) {
    %c0_i32 = arith.constant 0 : i32
    %c0_i32_0 = arith.constant 0 : i32
    %c0_i32_1 = arith.constant 0 : i32
    %c0_i32_2 = arith.constant 0 : i32
    return %c0_i32, %c0_i32_0, %c0_i32_1 : i32, i32, i32
  }
  func.func @transform_2(%arg0: i32) -> (i32, i32, i32) {
    %c0_i32 = arith.constant 0 : i32
    %c0_i32_0 = arith.constant 0 : i32
    %c0_i32_1 = arith.constant 0 : i32
    %c0_i32_2 = arith.constant 0 : i32
    return %c0_i32, %c0_i32_0, %c0_i32_1 : i32, i32, i32
  }
  func.func @transform_3(%arg0: i32) -> (i32, i32, i32) {
    %c0_i32 = arith.constant 0 : i32
    %c0_i32_0 = arith.constant 0 : i32
    %c0_i32_1 = arith.constant 0 : i32
    %c0_i32_2 = arith.constant 0 : i32
    return %c0_i32, %c0_i32_0, %c0_i32_1 : i32, i32, i32
  }
  func.func @transform_4(%arg0: i32) -> (i32, i32, i32, i32) {
    %c0_i32 = arith.constant 0 : i32
    %c0_i32_0 = arith.constant 0 : i32
    %c0_i32_1 = arith.constant 0 : i32
    %c0_i32_2 = arith.constant 0 : i32
    return %arg0, %c0_i32, %c0_i32_0, %c0_i32_1 : i32, i32, i32, i32
  }
}

</mosaic_0001>

<llo_original>
// kernel: tpu_custom_call.1
$region0: #{tpu_custom_call.1}
  #allocation0 [shape = 'u32[]', space=smem, size = 0x4, offset = 0x4, fixed_abs, tag = 'smem constant byte address 0x4 - core index']
  #allocation1 [shape = 'u32[144,128]{1,0:T(1,128)}', space=vmem, size = 0x12000, scoped, tag = 'internal scratch']
  %s0 = inlined_call_operand.hbm [shape: f32[2,8,16,16], index: 0, kind: input, shape index: {}, may-alias: {0,4}]
  %s1 = inlined_call_operand.vmem [shape: f32[7,16,16], index: 1, kind: input, shape index: {}]
  %s2 = inlined_call_operand.vmem [shape: f32[7,16,16], index: 2, kind: input, shape index: {}]
  %s3 = inlined_call_operand.vmem [shape: f32[7,16,16], index: 3, kind: input, shape index: {}]
  %s4 = inlined_call_operand.hbm [shape: f32[2,8,16,16], index: 4, kind: output, shape index: {}, may-alias: {0,4}]
  %s5 = sld [smem:[#allocation0]]
  $region60: #{tpu_custom_call.1} parent=0
    _
  %s7 = ssub.s32 1, %s5
  %s8 = scalar_select 0, %s7, %s5
  $region1: #{tpu_custom_call.1} parent=0
    #allocation2 [shape = 'u8[131072]{0}', space=vmem, size = 0x20000, scoped, tag = 'input window, operand 0']
    #allocation3 [shape = 's32[2]{0}', space=sflag, size = 0x8, scoped, tag = 'scoped memory for tpu_custom_call.1']
    #allocation4 [shape = 's32[2]{0}', space=sflag, size = 0x8, scoped, tag = 'scoped memory for tpu_custom_call.1']
    #allocation5 [shape = 'u8[131072]{0}', space=vmem, size = 0x20000, scoped, tag = 'output window, operand 0']
    %9 = vsyncpa [#allocation3], 0
    %s10 = scalar_lea.sflag [#allocation3], 1
    %11 = vsyncpa %s10, 0
    %12 = vsyncpa [#allocation4], 0
    %s13 = scalar_lea.sflag [#allocation4], 1
    %14 = vsyncpa %s13, 0
    loop: start=0, step=1, limit=4
    $region2: #{tpu_custom_call.1} parent=1 // loop_pre_header
      _
    $region3: #{tpu_custom_call.1} parent=1 // loop_header
      %s16 = sphi 0, %s20
      %p17 = scmp.ge.s32.totalorder %s16, 4
      %s26 = sphi 0, %s28
      %s29 = sphi 0, %s26
      %s30 = sphi 0, %s29
      %s46 = sphi 0, %s30
      %s50 = sphi 0, %s50
      %s52 = sphi 0, %s50
      %s53 = sphi 0, %s52
      %s67 = sphi 0, %s53
      %s71 = sphi 0, %s71
      %s73 = sphi 0, %s71
      %s74 = sphi 0, %s73
      %s88 = sphi 0, %s74
      %s92 = sphi 0, %s92
      %s94 = sphi 0, %s92
      %s95 = sphi 0, %s94
      %s109 = sphi 0, %s95
      %s115 = sphi 0, %s117
      %s118 = sphi 0, %s115
      %s119 = sphi 0, %s118
      %s135 = sphi 0, %s119
    $region4: #{tpu_custom_call.1} parent=1 // loop_header_branch
      %19 = sbr.rel (%p17) target = $region8
    $region5: #{tpu_custom_call.1} parent=1 // loop_body
      %s21 = ssub.s32 %s16, 1
      %s22 = ssub.s32 %s16, 2
      %s23 = sadd.s32 %s16, 1
      %s24 = ssub.s32 %s16, %s23
      %p25 = scmp.eq.s32.totalorder %s24, 0
      %s27 = sadd.s32 %s26, 1
      %s28 = scalar_select %p25, %s26, %s27
      %p31 = pneg %p25
      %p32 = scmp.eq.s32.totalorder %s16, 1
      %p33 = por %p31, %p32
      %p34 = scmp.ne.s32.totalorder %s26, %s29
      %p35 = scmp.eq.s32.totalorder %s16, 0
      %p36 = por %p34, %p35
      %p37 = scmp.ne.s32.totalorder %s26, %s29
      %p38 = scmp.eq.s32.totalorder %s21, 1
      %p39 = por %p37, %p38
      %p40 = scmp.ne.s32.totalorder %s29, %s30
      %p41 = scmp.eq.s32.totalorder %s21, 0
      %p42 = por %p40, %p41
      %p43 = scmp.ne.s32.totalorder %s29, %s30
      %p44 = scmp.eq.s32.totalorder %s22, 1
      %p45 = por %p43, %p44
      %p47 = scmp.ne.s32.totalorder %s30, %s46
      %p48 = scmp.eq.s32.totalorder %s22, 0
      %p49 = por %p47, %p48
      %s51 = sadd.s32 %s50, 1
      %p54 = scmp.eq.s32.totalorder %s16, 1
      %p55 = scmp.ne.s32.totalorder %s50, %s52
      %p56 = scmp.eq.s32.totalorder %s16, 0
      %p57 = por %p55, %p56
      %p58 = scmp.ne.s32.totalorder %s50, %s52
      %p59 = scmp.eq.s32.totalorder %s21, 1
      %p60 = por %p58, %p59
      %p61 = scmp.ne.s32.totalorder %s52, %s53
      %p62 = scmp.eq.s32.totalorder %s21, 0
      %p63 = por %p61, %p62
      %p64 = scmp.ne.s32.totalorder %s52, %s53
      %p65 = scmp.eq.s32.totalorder %s22, 1
      %p66 = por %p64, %p65
      %p68 = scmp.ne.s32.totalorder %s53, %s67
      %p69 = scmp.eq.s32.totalorder %s22, 0
      %p70 = por %p68, %p69
      %s72 = sadd.s32 %s71, 1
      %p75 = scmp.eq.s32.totalorder %s16, 1
      %p76 = scmp.ne.s32.totalorder %s71, %s73
      %p77 = scmp.eq.s32.totalorder %s16, 0
      %p78 = por %p76, %p77
      %p79 = scmp.ne.s32.totalorder %s71, %s73
      %p80 = scmp.eq.s32.totalorder %s21, 1
      %p81 = por %p79, %p80
      %p82 = scmp.ne.s32.totalorder %s73, %s74
      %p83 = scmp.eq.s32.totalorder %s21, 0
      %p84 = por %p82, %p83
      %p85 = scmp.ne.s32.totalorder %s73, %s74
      %p86 = scmp.eq.s32.totalorder %s22, 1
      %p87 = por %p85, %p86
      %p89 = scmp.ne.s32.totalorder %s74, %s88
      %p90 = scmp.eq.s32.totalorder %s22, 0
      %p91 = por %p89, %p90
      %s93 = sadd.s32 %s92, 1
      %p96 = scmp.eq.s32.totalorder %s16, 1
      %p97 = scmp.ne.s32.totalorder %s92, %s94
      %p98 = scmp.eq.s32.totalorder %s16, 0
      %p99 = por %p97, %p98
      %p100 = scmp.ne.s32.totalorder %s92, %s94
      %p101 = scmp.eq.s32.totalorder %s21, 1
      %p102 = por %p100, %p101
      %p103 = scmp.ne.s32.totalorder %s94, %s95
      %p104 = scmp.eq.s32.totalorder %s21, 0
      %p105 = por %p103, %p104
      %p106 = scmp.ne.s32.totalorder %s94, %s95
      %p107 = scmp.eq.s32.totalorder %s22, 1
      %p108 = por %p106, %p107
      %p110 = scmp.ne.s32.totalorder %s95, %s109
      %p111 = scmp.eq.s32.totalorder %s22, 0
      %p112 = por %p110, %p111
      %s113 = ssub.s32 %s16, %s23
      %p114 = scmp.eq.s32.totalorder %s113, 0
      %s116 = sadd.s32 %s115, 1
      %s117 = scalar_select %p114, %s115, %s116
      %p120 = pneg %p114
      %p121 = scmp.eq.s32.totalorder %s16, 1
      %p122 = por %p120, %p121
      %p123 = scmp.ne.s32.totalorder %s115, %s118
      %p124 = scmp.eq.s32.totalorder %s16, 0
      %p125 = por %p123, %p124
      %p126 = scmp.ne.s32.totalorder %s115, %s118
      %p127 = scmp.eq.s32.totalorder %s21, 1
      %p128 = por %p126, %p127
      %p129 = scmp.ne.s32.totalorder %s118, %s119
      %p130 = scmp.eq.s32.totalorder %s21, 0
      %p131 = por %p129, %p130
      %p132 = scmp.ne.s32.totalorder %s118, %s119
      %p133 = scmp.eq.s32.totalorder %s22, 1
      %p134 = por %p132, %p133
      %p136 = scmp.ne.s32.totalorder %s119, %s135
      %p137 = scmp.eq.s32.totalorder %s22, 0
      %p138 = por %p136, %p137
      %p139 = scmp.le.s32.totalorder 1, %s16
      %p140 = scmp.lt.s32.totalorder %s16, 3
      %p141 = pnand %p139, %p140
      %p142 = pneg %p141
      // Predicated region
      $region9: #{tpu_custom_call.1} parent=5 // pred_check
        _
      $region10: #{tpu_custom_call.1} parent=5 // pred_check_branch
        %144 = sbr.rel (%p141) target = $region12
      $region11: #{tpu_custom_call.1} parent=5 // pred_region
        %s145 = ssub.s32 %s16, 1
        // Predicated region
        $region13: #{tpu_custom_call.1} parent=11 // pred_check
          %p146 = pneg %p63
        $region14: #{tpu_custom_call.1} parent=11 // pred_check_branch
          %148 = sbr.rel (%p146) target = $region16
        $region15: #{tpu_custom_call.1} parent=11 // pred_region
          _
        $region16: #{tpu_custom_call.1} parent=11 // pred_fallthru
          _
        // Predicated region
        $region17: #{tpu_custom_call.1} parent=11 // pred_check
          %p149 = pneg %p84
        $region18: #{tpu_custom_call.1} parent=11 // pred_check_branch
          %151 = sbr.rel (%p149) target = $region20
        $region19: #{tpu_custom_call.1} parent=11 // pred_region
          _
        $region20: #{tpu_custom_call.1} parent=11 // pred_fallthru
          _
        // Predicated region
        $region21: #{tpu_custom_call.1} parent=11 // pred_check
          %p152 = pneg %p105
        $region22: #{tpu_custom_call.1} parent=11 // pred_check_branch
          %154 = sbr.rel (%p152) target = $region24
        $region23: #{tpu_custom_call.1} parent=11 // pred_region
          _
        $region24: #{tpu_custom_call.1} parent=11 // pred_fallthru
          _
      $region12: #{tpu_custom_call.1} parent=5 // pred_fallthru
        _
      %p155 = scmp.lt.s32.totalorder %s16, 2
      // Predicated region
      $region25: #{tpu_custom_call.1} parent=5 // pred_check
        %p156 = pneg %p155
      $region26: #{tpu_custom_call.1} parent=5 // pred_check_branch
        %158 = sbr.rel (%p156) target = $region28
      $region27: #{tpu_custom_call.1} parent=5 // pred_region
        // Predicated region
        $region29: #{tpu_custom_call.1} parent=27 // pred_check
          %p159 = pneg %p36
        $region30: #{tpu_custom_call.1} parent=27 // pred_check_branch
          %161 = sbr.rel (%p159) target = $region32
        $region31: #{tpu_custom_call.1} parent=27 // pred_region
          %s162 = sand.u32 %s26, 1
          %s163 = scalar_lea.sflag [#allocation3], %s162
          %s164 = sand.u32 %s26, 1
          %s165 = smul.addr %s164, 128
          %s166 = scalar_lea.vmem [#allocation2], %s165
          %s168 = ssub.s32 2048, 2048
          %169 = vsyncadd %s163, %s168
          %s170 = smul.addr %s16, 16
          %s171 = smul.addr %s170, 128
          %s172 = scalar_lea.hbm %s0, %s171
          %s173 = sshll.u32 %s166, 4
          %s174 = int_to_ptr.vmem [resolvable:$true] %s173
          %179 = dma.hbm_to_vmem [thread:$0]  %s172, 2048, %s174, %s163, 128, 128, 8
        $region32: #{tpu_custom_call.1} parent=27 // pred_fallthru
          _
      $region28: #{tpu_custom_call.1} parent=5 // pred_fallthru
        _
      %p180 = scmp.le.s32.totalorder 1, %s16
      %p181 = scmp.lt.s32.totalorder %s16, 3
      %p182 = pnand %p180, %p181
      %p183 = pneg %p182
      // Predicated region
      $region33: #{tpu_custom_call.1} parent=5 // pred_check
        _
      $region34: #{tpu_custom_call.1} parent=5 // pred_check_branch
        %185 = sbr.rel (%p182) target = $region36
      $region35: #{tpu_custom_call.1} parent=5 // pred_region
        %s186 = ssub.s32 %s16, 1
        %s187 = sand.u32 %s29, 1
        %s188 = scalar_lea.sflag [#allocation3], %s187
        %s189 = sand.u32 %s29, 1
        %s190 = smul.addr %s189, 128
        %s191 = scalar_lea.vmem [#allocation2], %s190
        // Predicated region
        $region37: #{tpu_custom_call.1} parent=35 // pred_check
          %p192 = pneg %p42
        $region38: #{tpu_custom_call.1} parent=35 // pred_check_branch
          %194 = sbr.rel (%p192) target = $region40
        $region39: #{tpu_custom_call.1} parent=35 // pred_region
          %195 = dma.done %s188, 2048
        $region40: #{tpu_custom_call.1} parent=35 // pred_fallthru
          _
        %s196 = sand.u32 %s29, 1
        %s197 = scalar_lea.sflag [#allocation3], %s196
        %s198 = sand.u32 %s29, 1
        %s199 = smul.addr %s198, 128
        %s200 = scalar_lea.vmem [#allocation2], %s199
        %p201 = pneg %p42
        %p202 = pneg %p39
        %p203 = pneg %p63
        %p204 = pneg %p60
        %p205 = pneg %p84
        %p206 = pneg %p81
        %p207 = pneg %p105
        %p208 = pneg %p102
        %p209 = pneg %p131
        %p210 = pneg %p128
        %s211 = sand.u32 %s118, 1
        %s212 = scalar_lea.sflag [#allocation4], %s211
        %s213 = sand.u32 %s118, 1
        %s214 = smul.addr %s213, 128
        %s215 = scalar_lea.vmem [#allocation5], %s214
        loop: start=0, step=1, limit=8
        $region41: #{tpu_custom_call.1} parent=35 // loop_pre_header
          _
        $region42: #{tpu_custom_call.1} parent=35 // loop_header
          %s217 = sphi 0, %s221
          %p218 = scmp.ge.s32.totalorder %s217, 8
          %v222 = vphi -inf, %v230
          %v223 = vphi -inf, %v231
          %v224 = vphi 0.0, %v232
          %v225 = vphi 0.0, %v233
        $region43: #{tpu_custom_call.1} parent=35 // loop_header_branch
          %220 = sbr.rel (%p218) target = $region47
        $region44: #{tpu_custom_call.1} parent=35 // loop_body
          %s226 = smul.u32 %s217, 16
          %s227 = scalar_lea.vmem %s191, %s226 [#allocation2]
          %v228 = vld [vmem:[%s227] sm:$0xff]
          %v229 = vld [vmem:[%s227 + $0x8] sm:$0xff]
          %v230 = vmax.f32 %v222, %v228
          %v231 = vmax.f32 %v223, %v229
          %v232 = vadd.f32 %v224, %v228
          %v233 = vadd.f32 %v225, %v229
        $region45: #{tpu_custom_call.1} parent=35 // loop_footer
          %s221 = sadd.s32 1, %s217
        $region46: #{tpu_custom_call.1} parent=35 // loop_footer_branch
          %216 = sbr.rel target = $region42
        $region47: #{tpu_custom_call.1} parent=35 // loop_exit
          _
        %v234 = vmul.f32 %v224, 0.125
        %v235 = vmul.f32 %v225, 0.125
        %v236 = vld [vmem:[%s1] sm:$0xff]
        %v237 = vld [vmem:[%s1 + $0x8] sm:$0xff]
        %v238 = vld [vmem:[%s2] sm:$0xff]
        %v239 = vld [vmem:[%s2 + $0x8] sm:$0xff]
        %vm240 = vcmask 130048
        %v242 = vsel %vm240, %v238, 0
        %v245 = vsel %vm240, %v239, 0
        %247 = vmatprep.subr.mxu0 0.0
        %248 = vmatpush1.msra.mxu0 %v234
        %249 = vmatprep.subr.mxu0 0.0
        %250 = vmatpush1.msra.mxu0 %v235
        %251 = vmatprep.subr.mxu0 0.0
        %252 = vmatpush1.msra.mxu0 0.0
        %253 = vmatprep.subr.mxu0 0.0
        %254 = vmatpush1.msra.mxu0 0.0
        %255 = vmatprep.subr.mxu0 0.0
        %256 = vmatpush1.msra.mxu0 0.0
        %257 = vmatprep.subr.mxu0 0.0
        %258 = vmatpush1.msra.mxu0 0.0
        %259 = vmatprep.subr.mxu0 0.0
        %260 = vmatpush1.msra.mxu0 0.0
        %261 = vmatprep.subr.mxu0 0.0
        %262 = vmatpush1.msra.mxu0 0.0
        %263 = vmatprep.subr.mxu0 0.0
        %264 = vmatpush1.msra.mxu0 0.0
        %265 = vmatprep.subr.mxu0 0.0
        %266 = vmatpush1.msra.mxu0 0.0
        %267 = vmatprep.subr.mxu0 0.0
        %268 = vmatpush1.msra.mxu0 0.0
        %269 = vmatprep.subr.mxu0 0.0
        %270 = vmatpush1.msra.mxu0 0.0
        %271 = vmatprep.subr.mxu0 0.0
        %272 = vmatpush1.msra.mxu0 0.0
        %273 = vmatprep.subr.mxu0 0.0
        %274 = vmatpush1.msra.mxu0 0.0
        %275 = vmatprep.subr.mxu0 0.0
        %276 = vmatpush1.msra.mxu0 0.0
        %277 = vmatprep.subr.mxu0 0.0
        %278 = vmatpush1.msra.mxu0 0.0
        %279 = vmatprep.subr.mxu0 0.0
        %280 = vmatpush1.msra.mxu0 0.0
        %281 = vmatprep.subr.mxu0 0.0
        %282 = vmatpush1.msra.mxu0 0.0
        %283 = vmatprep.subr.mxu0 0.0
        %284 = vmatpush1.msra.mxu0 0.0
        %285 = vmatprep.subr.mxu0 0.0
        %286 = vmatpush1.msra.mxu0 0.0
        %287 = vmatprep.subr.mxu0 0.0
        %288 = vmatpush1.msra.mxu0 0.0
        %289 = vmatprep.subr.mxu0 0.0
        %290 = vmatpush1.msra.mxu0 0.0
        %291 = vmatprep.subr.mxu0 0.0
        %292 = vmatpush1.msra.mxu0 0.0
        %293 = vmatprep.subr.mxu0 0.0
        %294 = vmatpush1.msra.mxu0 0.0
        %295 = vmatprep.subr.mxu0 0.0
        %296 = vmatpush1.msra.mxu0 0.0
        %297 = vmatprep.subr.mxu0 0.0
        %298 = vmatpush1.msra.mxu0 0.0
        %299 = vmatprep.subr.mxu0 0.0
        %300 = vmatpush1.msra.mxu0 0.0
        %301 = vmatprep.subr.mxu0 0.0
        %302 = vmatpush1.msra.mxu0 0.0
        %303 = vmatprep.subr.mxu0 0.0
        %304 = vmatpush1.msra.mxu0 0.0
        %305 = vmatprep.subr.mxu0 0.0
        %306 = vmatpush1.msra.mxu0 0.0
        %307 = vmatprep.subr.mxu0 0.0
        %308 = vmatpush1.msra.mxu0 0.0
        %309 = vmatprep.subr.mxu0 0.0
        %310 = vmatpush1.msra.mxu0 0.0
        %311 = vmatprep.mubr.f32.mxu0 0.0
        %312 = vmatmul.mubr.f32.gmra.mrb[0].mxu0 %v242
        %v313 = vpop.f32.mrb[0].mxu0
        %v314 = vadd.f32 0.0, %v313
        %v315 = vpop.f32.mrb[0].mxu0
        %316 = vmatprep.mubr.f32.mxu0 0.0
        %317 = vmatmul.mubr.f32.gmra.mrb[0].mxu0 %v245
        %v318 = vpop.f32.mrb[0].mxu0
        %v319 = vadd.f32 0.0, %v318
        %v320 = vpop.f32.mrb[0].mxu0
        %321 = vdwg.mxu0
        %v323 = vsel %vm240, %v236, 0
        %v326 = vsel %vm240, %v237, 0
        %328 = vmatprep.subr.mxu0 0.0
        %329 = vmatpush1.msra.mxu0 %v222
        %330 = vmatprep.subr.mxu0 0.0
        %331 = vmatpush1.msra.mxu0 %v223
        %332 = vmatprep.subr.mxu0 0.0
        %333 = vmatpush1.msra.mxu0 0.0
        %334 = vmatprep.subr.mxu0 0.0
        %335 = vmatpush1.msra.mxu0 0.0
        %336 = vmatprep.subr.mxu0 0.0
        %337 = vmatpush1.msra.mxu0 0.0
        %338 = vmatprep.subr.mxu0 0.0
        %339 = vmatpush1.msra.mxu0 0.0
        %340 = vmatprep.subr.mxu0 0.0
        %341 = vmatpush1.msra.mxu0 0.0
        %342 = vmatprep.subr.mxu0 0.0
        %343 = vmatpush1.msra.mxu0 0.0
        %344 = vmatprep.subr.mxu0 0.0
        %345 = vmatpush1.msra.mxu0 0.0
        %346 = vmatprep.subr.mxu0 0.0
        %347 = vmatpush1.msra.mxu0 0.0
        %348 = vmatprep.subr.mxu0 0.0
        %349 = vmatpush1.msra.mxu0 0.0
        %350 = vmatprep.subr.mxu0 0.0
        %351 = vmatpush1.msra.mxu0 0.0
        %352 = vmatprep.subr.mxu0 0.0
        %353 = vmatpush1.msra.mxu0 0.0
        %354 = vmatprep.subr.mxu0 0.0
        %355 = vmatpush1.msra.mxu0 0.0
        %356 = vmatprep.subr.mxu0 0.0
        %357 = vmatpush1.msra.mxu0 0.0
        %358 = vmatprep.subr.mxu0 0.0
        %359 = vmatpush1.msra.mxu0 0.0
        %360 = vmatprep.subr.mxu0 0.0
        %361 = vmatpush1.msra.mxu0 0.0
        %362 = vmatprep.subr.mxu0 0.0
        %363 = vmatpush1.msra.mxu0 0.0
        %364 = vmatprep.subr.mxu0 0.0
        %365 = vmatpush1.msra.mxu0 0.0
        %366 = vmatprep.subr.mxu0 0.0
        %367 = vmatpush1.msra.mxu0 0.0
        %368 = vmatprep.subr.mxu0 0.0
        %369 = vmatpush1.msra.mxu0 0.0
        %370 = vmatprep.subr.mxu0 0.0
        %371 = vmatpush1.msra.mxu0 0.0
        %372 = vmatprep.subr.mxu0 0.0
        %373 = vmatpush1.msra.mxu0 0.0
        %374 = vmatprep.subr.mxu0 0.0
        %375 = vmatpush1.msra.mxu0 0.0
        %376 = vmatprep.subr.mxu0 0.0
        %377 = vmatpush1.msra.mxu0 0.0
        %378 = vmatprep.subr.mxu0 0.0
        %379 = vmatpush1.msra.mxu0 0.0
        %380 = vmatprep.subr.mxu0 0.0
        %381 = vmatpush1.msra.mxu0 0.0
        %382 = vmatprep.subr.mxu0 0.0
        %383 = vmatpush1.msra.mxu0 0.0
        %384 = vmatprep.subr.mxu0 0.0
        %385 = vmatpush1.msra.mxu0 0.0
        %386 = vmatprep.subr.mxu0 0.0
        %387 = vmatpush1.msra.mxu0 0.0
        %388 = vmatprep.subr.mxu0 0.0
        %389 = vmatpush1.msra.mxu0 0.0
        %390 = vmatprep.subr.mxu0 0.0
        %391 = vmatpush1.msra.mxu0 0.0
        %392 = vmatprep.mubr.f32.mxu0 0.0
        %393 = vmatmul.mubr.f32.gmra.mrb[0].mxu0 %v323
        %v394 = vpop.f32.mrb[0].mxu0
        %v395 = vadd.f32 %v314, %v394
        %v396 = vpop.f32.mrb[0].mxu0
        %397 = vmatprep.mubr.f32.mxu0 0.0
        %398 = vmatmul.mubr.f32.gmra.mrb[0].mxu0 %v326
        %v399 = vpop.f32.mrb[0].mxu0
        %v400 = vadd.f32 %v319, %v399
        %v401 = vpop.f32.mrb[0].mxu0
        %402 = vdwg.mxu0
        %v403 = vld [vmem:[%s3] sm:$0xff]
        %v404 = vld [vmem:[%s3 + $0x8] sm:$0xff]
        %s405 = scalar_lea.vmem %s1, 16
        %v406 = vld [vmem:[%s405] sm:$0xff]
        %v407 = vld [vmem:[%s405 + $0x8] sm:$0xff]
        %s408 = scalar_lea.vmem %s2, 16
        %v409 = vld [vmem:[%s408] sm:$0xff]
        %v410 = vld [vmem:[%s408 + $0x8] sm:$0xff]
        %v412 = vsel %vm240, %v409, 0
        %v415 = vsel %vm240, %v410, 0
        %417 = vmatprep.subr.mxu0 0.0
        %418 = vmatpush1.msra.mxu0 %v234
        %419 = vmatprep.subr.mxu0 0.0
        %420 = vmatpush1.msra.mxu0 %v235
        %421 = vmatprep.subr.mxu0 0.0
        %422 = vmatpush1.msra.mxu0 0.0
        %423 = vmatprep.subr.mxu0 0.0
        %424 = vmatpush1.msra.mxu0 0.0
        %425 = vmatprep.subr.mxu0 0.0
        %426 = vmatpush1.msra.mxu0 0.0
        %427 = vmatprep.subr.mxu0 0.0
        %428 = vmatpush1.msra.mxu0 0.0
        %429 = vmatprep.subr.mxu0 0.0
        %430 = vmatpush1.msra.mxu0 0.0
        %431 = vmatprep.subr.mxu0 0.0
        %432 = vmatpush1.msra.mxu0 0.0
        %433 = vmatprep.subr.mxu0 0.0
        %434 = vmatpush1.msra.mxu0 0.0
        %435 = vmatprep.subr.mxu0 0.0
        %436 = vmatpush1.msra.mxu0 0.0
        %437 = vmatprep.subr.mxu0 0.0
        %438 = vmatpush1.msra.mxu0 0.0
        %439 = vmatprep.subr.mxu0 0.0
        %440 = vmatpush1.msra.mxu0 0.0
        %441 = vmatprep.subr.mxu0 0.0
        %442 = vmatpush1.msra.mxu0 0.0
        %443 = vmatprep.subr.mxu0 0.0
        %444 = vmatpush1.msra.mxu0 0.0
        %445 = vmatprep.subr.mxu0 0.0
        %446 = vmatpush1.msra.mxu0 0.0
        %447 = vmatprep.subr.mxu0 0.0
        %448 = vmatpush1.msra.mxu0 0.0
        %449 = vmatprep.subr.mxu0 0.0
        %450 = vmatpush1.msra.mxu0 0.0
        %451 = vmatprep.subr.mxu0 0.0
        %452 = vmatpush1.msra.mxu0 0.0
        %453 = vmatprep.subr.mxu0 0.0
        %454 = vmatpush1.msra.mxu0 0.0
        %455 = vmatprep.subr.mxu0 0.0
        %456 = vmatpush1.msra.mxu0 0.0
        %457 = vmatprep.subr.mxu0 0.0
        %458 = vmatpush1.msra.mxu0 0.0
        %459 = vmatprep.subr.mxu0 0.0
        %460 = vmatpush1.msra.mxu0 0.0
        %461 = vmatprep.subr.mxu0 0.0
        %462 = vmatpush1.msra.mxu0 0.0
        %463 = vmatprep.subr.mxu0 0.0
        %464 = vmatpush1.msra.mxu0 0.0
        %465 = vmatprep.subr.mxu0 0.0
        %466 = vmatpush1.msra.mxu0 0.0
        %467 = vmatprep.subr.mxu0 0.0
        %468 = vmatpush1.msra.mxu0 0.0
        %469 = vmatprep.subr.mxu0 0.0
        %470 = vmatpush1.msra.mxu0 0.0
        %471 = vmatprep.subr.mxu0 0.0
        %472 = vmatpush1.msra.mxu0 0.0
        %473 = vmatprep.subr.mxu0 0.0
        %474 = vmatpush1.msra.mxu0 0.0
        %475 = vmatprep.subr.mxu0 0.0
        %476 = vmatpush1.msra.mxu0 0.0
        %477 = vmatprep.subr.mxu0 0.0
        %478 = vmatpush1.msra.mxu0 0.0
        %479 = vmatprep.subr.mxu0 0.0
        %480 = vmatpush1.msra.mxu0 0.0
        %481 = vmatprep.mubr.f32.mxu0 0.0
        %482 = vmatmul.mubr.f32.gmra.mrb[0].mxu0 %v412
        %v483 = vpop.f32.mrb[0].mxu0
        %v484 = vadd.f32 0.0, %v483
        %v485 = vpop.f32.mrb[0].mxu0
        %486 = vmatprep.mubr.f32.mxu0 0.0
        %487 = vmatmul.mubr.f32.gmra.mrb[0].mxu0 %v415
        %v488 = vpop.f32.mrb[0].mxu0
        %v489 = vadd.f32 0.0, %v488
        %v490 = vpop.f32.mrb[0].mxu0
        %491 = vdwg.mxu0
        %v493 = vsel %vm240, %v406, 0
        %v496 = vsel %vm240, %v407, 0
        %498 = vmatprep.subr.mxu0 0.0
        %499 = vmatpush1.msra.mxu0 %v222
        %500 = vmatprep.subr.mxu0 0.0
        %501 = vmatpush1.msra.mxu0 %v223
        %502 = vmatprep.subr.mxu0 0.0
        %503 = vmatpush1.msra.mxu0 0.0
        %504 = vmatprep.subr.mxu0 0.0
        %505 = vmatpush1.msra.mxu0 0.0
        %506 = vmatprep.subr.mxu0 0.0
        %507 = vmatpush1.msra.mxu0 0.0
        %508 = vmatprep.subr.mxu0 0.0
        %509 = vmatpush1.msra.mxu0 0.0
        %510 = vmatprep.subr.mxu0 0.0
        %511 = vmatpush1.msra.mxu0 0.0
        %512 = vmatprep.subr.mxu0 0.0
        %513 = vmatpush1.msra.mxu0 0.0
        %514 = vmatprep.subr.mxu0 0.0
        %515 = vmatpush1.msra.mxu0 0.0
        %516 = vmatprep.subr.mxu0 0.0
        %517 = vmatpush1.msra.mxu0 0.0
        %518 = vmatprep.subr.mxu0 0.0
        %519 = vmatpush1.msra.mxu0 0.0
        %520 = vmatprep.subr.mxu0 0.0
        %521 = vmatpush1.msra.mxu0 0.0
        %522 = vmatprep.subr.mxu0 0.0
        %523 = vmatpush1.msra.mxu0 0.0
        %524 = vmatprep.subr.mxu0 0.0
        %525 = vmatpush1.msra.mxu0 0.0
        %526 = vmatprep.subr.mxu0 0.0
        %527 = vmatpush1.msra.mxu0 0.0
        %528 = vmatprep.subr.mxu0 0.0
        %529 = vmatpush1.msra.mxu0 0.0
        %530 = vmatprep.subr.mxu0 0.0
        %531 = vmatpush1.msra.mxu0 0.0
        %532 = vmatprep.subr.mxu0 0.0
        %533 = vmatpush1.msra.mxu0 0.0
        %534 = vmatprep.subr.mxu0 0.0
        %535 = vmatpush1.msra.mxu0 0.0
        %536 = vmatprep.subr.mxu0 0.0
        %537 = vmatpush1.msra.mxu0 0.0
        %538 = vmatprep.subr.mxu0 0.0
        %539 = vmatpush1.msra.mxu0 0.0
        %540 = vmatprep.subr.mxu0 0.0
        %541 = vmatpush1.msra.mxu0 0.0
        %542 = vmatprep.subr.mxu0 0.0
        %543 = vmatpush1.msra.mxu0 0.0
        %544 = vmatprep.subr.mxu0 0.0
        %545 = vmatpush1.msra.mxu0 0.0
        %546 = vmatprep.subr.mxu0 0.0
        %547 = vmatpush1.msra.mxu0 0.0
        %548 = vmatprep.subr.mxu0 0.0
        %549 = vmatpush1.msra.mxu0 0.0
        %550 = vmatprep.subr.mxu0 0.0
        %551 = vmatpush1.msra.mxu0 0.0
        %552 = vmatprep.subr.mxu0 0.0
        %553 = vmatpush1.msra.mxu0 0.0
        %554 = vmatprep.subr.mxu0 0.0
        %555 = vmatpush1.msra.mxu0 0.0
        %556 = vmatprep.subr.mxu0 0.0
        %557 = vmatpush1.msra.mxu0 0.0
        %558 = vmatprep.subr.mxu0 0.0
        %559 = vmatpush1.msra.mxu0 0.0
        %560 = vmatprep.subr.mxu0 0.0
        %561 = vmatpush1.msra.mxu0 0.0
        %562 = vmatprep.mubr.f32.mxu0 0.0
        %563 = vmatmul.mubr.f32.gmra.mrb[0].mxu0 %v493
        %v564 = vpop.f32.mrb[0].mxu0
        %v565 = vadd.f32 %v484, %v564
        %v566 = vpop.f32.mrb[0].mxu0
        %567 = vmatprep.mubr.f32.mxu0 0.0
        %568 = vmatmul.mubr.f32.gmra.mrb[0].mxu0 %v496
        %v569 = vpop.f32.mrb[0].mxu0
        %v570 = vadd.f32 %v489, %v569
        %v571 = vpop.f32.mrb[0].mxu0
        %572 = vdwg.mxu0
        %s573 = scalar_lea.vmem %s3, 16
        %v574 = vld [vmem:[%s573] sm:$0xff]
        %v575 = vld [vmem:[%s573 + $0x8] sm:$0xff]
        %v577 = vsel %vm240, %v565, 0
        %v580 = vsel %vm240, %v570, 0
        %582 = vmatprep.subr.mxu0 0.0
        %583 = vmatpush1.msra.mxu0 %v574
        %584 = vmatprep.subr.mxu0 0.0
        %585 = vmatpush1.msra.mxu0 %v575
        %586 = vmatprep.subr.mxu0 0.0
        %587 = vmatpush1.msra.mxu0 0.0
        %588 = vmatprep.subr.mxu0 0.0
        %589 = vmatpush1.msra.mxu0 0.0
        %590 = vmatprep.subr.mxu0 0.0
        %591 = vmatpush1.msra.mxu0 0.0
        %592 = vmatprep.subr.mxu0 0.0
        %593 = vmatpush1.msra.mxu0 0.0
        %594 = vmatprep.subr.mxu0 0.0
        %595 = vmatpush1.msra.mxu0 0.0
        %596 = vmatprep.subr.mxu0 0.0
        %597 = vmatpush1.msra.mxu0 0.0
        %598 = vmatprep.subr.mxu0 0.0
        %599 = vmatpush1.msra.mxu0 0.0
        %600 = vmatprep.subr.mxu0 0.0
        %601 = vmatpush1.msra.mxu0 0.0
        %602 = vmatprep.subr.mxu0 0.0
        %603 = vmatpush1.msra.mxu0 0.0
        %604 = vmatprep.subr.mxu0 0.0
        %605 = vmatpush1.msra.mxu0 0.0
        %606 = vmatprep.subr.mxu0 0.0
        %607 = vmatpush1.msra.mxu0 0.0
        %608 = vmatprep.subr.mxu0 0.0
        %609 = vmatpush1.msra.mxu0 0.0
        %610 = vmatprep.subr.mxu0 0.0
        %611 = vmatpush1.msra.mxu0 0.0
        %612 = vmatprep.subr.mxu0 0.0
        %613 = vmatpush1.msra.mxu0 0.0
        %614 = vmatprep.subr.mxu0 0.0
        %615 = vmatpush1.msra.mxu0 0.0
        %616 = vmatprep.subr.mxu0 0.0
        %617 = vmatpush1.msra.mxu0 0.0
        %618 = vmatprep.subr.mxu0 0.0
        %619 = vmatpush1.msra.mxu0 0.0
        %620 = vmatprep.subr.mxu0 0.0
        %621 = vmatpush1.msra.mxu0 0.0
        %622 = vmatprep.subr.mxu0 0.0
        %623 = vmatpush1.msra.mxu0 0.0
        %624 = vmatprep.subr.mxu0 0.0
        %625 = vmatpush1.msra.mxu0 0.0
        %626 = vmatprep.subr.mxu0 0.0
        %627 = vmatpush1.msra.mxu0 0.0
        %628 = vmatprep.subr.mxu0 0.0
        %629 = vmatpush1.msra.mxu0 0.0
        %630 = vmatprep.subr.mxu0 0.0
        %631 = vmatpush1.msra.mxu0 0.0
        %632 = vmatprep.subr.mxu0 0.0
        %633 = vmatpush1.msra.mxu0 0.0
        %634 = vmatprep.subr.mxu0 0.0
        %635 = vmatpush1.msra.mxu0 0.0
        %636 = vmatprep.subr.mxu0 0.0
        %637 = vmatpush1.msra.mxu0 0.0
        %638 = vmatprep.subr.mxu0 0.0
        %639 = vmatpush1.msra.mxu0 0.0
        %640 = vmatprep.subr.mxu0 0.0
        %641 = vmatpush1.msra.mxu0 0.0
        %642 = vmatprep.subr.mxu0 0.0
        %643 = vmatpush1.msra.mxu0 0.0
        %644 = vmatprep.subr.mxu0 0.0
        %645 = vmatpush1.msra.mxu0 0.0
        %646 = vmatprep.mubr.f32.mxu0 0.0
        %647 = vmatmul.mubr.f32.gmra.mrb[0].mxu0 %v577
        %v648 = vpop.f32.mrb[0].mxu0
        %v649 = vadd.f32 0.0, %v648
        %v650 = vpop.f32.mrb[0].mxu0
        %651 = vmatprep.mubr.f32.mxu0 0.0
        %652 = vmatmul.mubr.f32.gmra.mrb[0].mxu0 %v580
        %v653 = vpop.f32.mrb[0].mxu0
        %v654 = vadd.f32 0.0, %v653
        %v655 = vpop.f32.mrb[0].mxu0
        %656 = vdwg.mxu0
        %v658 = vsel %vm240, %v395, 0
        %v661 = vsel %vm240, %v400, 0
        %663 = vmatprep.subr.mxu0 0.0
        %664 = vmatpush1.msra.mxu0 %v403
        %665 = vmatprep.subr.mxu0 0.0
        %666 = vmatpush1.msra.mxu0 %v404
        %667 = vmatprep.subr.mxu0 0.0
        %668 = vmatpush1.msra.mxu0 0.0
        %669 = vmatprep.subr.mxu0 0.0
        %670 = vmatpush1.msra.mxu0 0.0
        %671 = vmatprep.subr.mxu0 0.0
        %672 = vmatpush1.msra.mxu0 0.0
        %673 = vmatprep.subr.mxu0 0.0
        %674 = vmatpush1.msra.mxu0 0.0
        %675 = vmatprep.subr.mxu0 0.0
        %676 = vmatpush1.msra.mxu0 0.0
        %677 = vmatprep.subr.mxu0 0.0
        %678 = vmatpush1.msra.mxu0 0.0
        %679 = vmatprep.subr.mxu0 0.0
        %680 = vmatpush1.msra.mxu0 0.0
        %681 = vmatprep.subr.mxu0 0.0
        %682 = vmatpush1.msra.mxu0 0.0
        %683 = vmatprep.subr.mxu0 0.0
        %684 = vmatpush1.msra.mxu0 0.0
        %685 = vmatprep.subr.mxu0 0.0
        %686 = vmatpush1.msra.mxu0 0.0
        %687 = vmatprep.subr.mxu0 0.0
        %688 = vmatpush1.msra.mxu0 0.0
        %689 = vmatprep.subr.mxu0 0.0
        %690 = vmatpush1.msra.mxu0 0.0
        %691 = vmatprep.subr.mxu0 0.0
        %692 = vmatpush1.msra.mxu0 0.0
        %693 = vmatprep.subr.mxu0 0.0
        %694 = vmatpush1.msra.mxu0 0.0
        %695 = vmatprep.subr.mxu0 0.0
        %696 = vmatpush1.msra.mxu0 0.0
        %697 = vmatprep.subr.mxu0 0.0
        %698 = vmatpush1.msra.mxu0 0.0
        %699 = vmatprep.subr.mxu0 0.0
        %700 = vmatpush1.msra.mxu0 0.0
        %701 = vmatprep.subr.mxu0 0.0
        %702 = vmatpush1.msra.mxu0 0.0
        %703 = vmatprep.subr.mxu0 0.0
        %704 = vmatpush1.msra.mxu0 0.0
        %705 = vmatprep.subr.mxu0 0.0
        %706 = vmatpush1.msra.mxu0 0.0
        %707 = vmatprep.subr.mxu0 0.0
        %708 = vmatpush1.msra.mxu0 0.0
        %709 = vmatprep.subr.mxu0 0.0
        %710 = vmatpush1.msra.mxu0 0.0
        %711 = vmatprep.subr.mxu0 0.0
        %712 = vmatpush1.msra.mxu0 0.0
        %713 = vmatprep.subr.mxu0 0.0
        %714 = vmatpush1.msra.mxu0 0.0
        %715 = vmatprep.subr.mxu0 0.0
        %716 = vmatpush1.msra.mxu0 0.0
        %717 = vmatprep.subr.mxu0 0.0
        %718 = vmatpush1.msra.mxu0 0.0
        %719 = vmatprep.subr.mxu0 0.0
        %720 = vmatpush1.msra.mxu0 0.0
        %721 = vmatprep.subr.mxu0 0.0
        %722 = vmatpush1.msra.mxu0 0.0
        %723 = vmatprep.subr.mxu0 0.0
        %724 = vmatpush1.msra.mxu0 0.0
        %725 = vmatprep.subr.mxu0 0.0
        %726 = vmatpush1.msra.mxu0 0.0
        %727 = vmatprep.mubr.f32.mxu0 0.0
        %728 = vmatmul.mubr.f32.gmra.mrb[0].mxu0 %v658
        %v729 = vpop.f32.mrb[0].mxu0
        %v730 = vadd.f32 %v649, %v729
        %v731 = vpop.f32.mrb[0].mxu0
        %732 = vmatprep.mubr.f32.mxu0 0.0
        %733 = vmatmul.mubr.f32.gmra.mrb[0].mxu0 %v661
        %v734 = vpop.f32.mrb[0].mxu0
        %v735 = vadd.f32 %v654, %v734
        %v736 = vpop.f32.mrb[0].mxu0
        %737 = vdwg.mxu0
        %s738 = scalar_lea.vmem %s1, 32
        %v739 = vld [vmem:[%s738] sm:$0xff]
        %v740 = vld [vmem:[%s738 + $0x8] sm:$0xff]
        %s741 = scalar_lea.vmem %s2, 32
        %v742 = vld [vmem:[%s741] sm:$0xff]
        %v743 = vld [vmem:[%s741 + $0x8] sm:$0xff]
        %v745 = vsel %vm240, %v742, 0
        %v748 = vsel %vm240, %v743, 0
        %750 = vmatprep.subr.mxu0 0.0
        %751 = vmatpush1.msra.mxu0 %v234
        %752 = vmatprep.subr.mxu0 0.0
        %753 = vmatpush1.msra.mxu0 %v235
        %754 = vmatprep.subr.mxu0 0.0
        %755 = vmatpush1.msra.mxu0 0.0
        %756 = vmatprep.subr.mxu0 0.0
        %757 = vmatpush1.msra.mxu0 0.0
        %758 = vmatprep.subr.mxu0 0.0
        %759 = vmatpush1.msra.mxu0 0.0
        %760 = vmatprep.subr.mxu0 0.0
        %761 = vmatpush1.msra.mxu0 0.0
        %762 = vmatprep.subr.mxu0 0.0
        %763 = vmatpush1.msra.mxu0 0.0
        %764 = vmatprep.subr.mxu0 0.0
        %765 = vmatpush1.msra.mxu0 0.0
        %766 = vmatprep.subr.mxu0 0.0
        %767 = vmatpush1.msra.mxu0 0.0
        %768 = vmatprep.subr.mxu0 0.0
        %769 = vmatpush1.msra.mxu0 0.0
        %770 = vmatprep.subr.mxu0 0.0
        %771 = vmatpush1.msra.mxu0 0.0
        %772 = vmatprep.subr.mxu0 0.0
        %773 = vmatpush1.msra.mxu0 0.0
        %774 = vmatprep.subr.mxu0 0.0
        %775 = vmatpush1.msra.mxu0 0.0
        %776 = vmatprep.subr.mxu0 0.0
        %777 = vmatpush1.msra.mxu0 0.0
        %778 = vmatprep.subr.mxu0 0.0
        %779 = vmatpush1.msra.mxu0 0.0
        %780 = vmatprep.subr.mxu0 0.0
        %781 = vmatpush1.msra.mxu0 0.0
        %782 = vmatprep.subr.mxu0 0.0
        %783 = vmatpush1.msra.mxu0 0.0
        %784 = vmatprep.subr.mxu0 0.0
        %785 = vmatpush1.msra.mxu0 0.0
        %786 = vmatprep.subr.mxu0 0.0
        %787 = vmatpush1.msra.mxu0 0.0
        %788 = vmatprep.subr.mxu0 0.0
        %789 = vmatpush1.msra.mxu0 0.0
        %790 = vmatprep.subr.mxu0 0.0
        %791 = vmatpush1.msra.mxu0 0.0
        %792 = vmatprep.subr.mxu0 0.0
        %793 = vmatpush1.msra.mxu0 0.0
        %794 = vmatprep.subr.mxu0 0.0
        %795 = vmatpush1.msra.mxu0 0.0
        %796 = vmatprep.subr.mxu0 0.0
        %797 = vmatpush1.msra.mxu0 0.0
        %798 = vmatprep.subr.mxu0 0.0
        %799 = vmatpush1.msra.mxu0 0.0
        %800 = vmatprep.subr.mxu0 0.0
        %801 = vmatpush1.msra.mxu0 0.0
        %802 = vmatprep.subr.mxu0 0.0
        %803 = vmatpush1.msra.mxu0 0.0
        %804 = vmatprep.subr.mxu0 0.0
        %805 = vmatpush1.msra.mxu0 0.0
        %806 = vmatprep.subr.mxu0 0.0
        %807 = vmatpush1.msra.mxu0 0.0
        %808 = vmatprep.subr.mxu0 0.0
        %809 = vmatpush1.msra.mxu0 0.0
        %810 = vmatprep.subr.mxu0 0.0
        %811 = vmatpush1.msra.mxu0 0.0
        %812 = vmatprep.subr.mxu0 0.0
        %813 = vmatpush1.msra.mxu0 0.0
        %814 = vmatprep.mubr.f32.mxu0 0.0
        %815 = vmatmul.mubr.f32.gmra.mrb[0].mxu0 %v745
        %v816 = vpop.f32.mrb[0].mxu0
        %v817 = vadd.f32 0.0, %v816
        %v818 = vpop.f32.mrb[0].mxu0
        %819 = vmatprep.mubr.f32.mxu0 0.0
        %820 = vmatmul.mubr.f32.gmra.mrb[0].mxu0 %v748
        %v821 = vpop.f32.mrb[0].mxu0
        %v822 = vadd.f32 0.0, %v821
        %v823 = vpop.f32.mrb[0].mxu0
        %824 = vdwg.mxu0
        %v826 = vsel %vm240, %v739, 0
        %v829 = vsel %vm240, %v740, 0
        %831 = vmatprep.subr.mxu0 0.0
        %832 = vmatpush1.msra.mxu0 %v222
        %833 = vmatprep.subr.mxu0 0.0
        %834 = vmatpush1.msra.mxu0 %v223
        %835 = vmatprep.subr.mxu0 0.0
        %836 = vmatpush1.msra.mxu0 0.0
        %837 = vmatprep.subr.mxu0 0.0
        %838 = vmatpush1.msra.mxu0 0.0
        %839 = vmatprep.subr.mxu0 0.0
        %840 = vmatpush1.msra.mxu0 0.0
        %841 = vmatprep.subr.mxu0 0.0
        %842 = vmatpush1.msra.mxu0 0.0
        %843 = vmatprep.subr.mxu0 0.0
        %844 = vmatpush1.msra.mxu0 0.0
        %845 = vmatprep.subr.mxu0 0.0
        %846 = vmatpush1.msra.mxu0 0.0
        %847 = vmatprep.subr.mxu0 0.0
        %848 = vmatpush1.msra.mxu0 0.0
        %849 = vmatprep.subr.mxu0 0.0
        %850 = vmatpush1.msra.mxu0 0.0
        %851 = vmatprep.subr.mxu0 0.0
        %852 = vmatpush1.msra.mxu0 0.0
        %853 = vmatprep.subr.mxu0 0.0
        %854 = vmatpush1.msra.mxu0 0.0
        %855 = vmatprep.subr.mxu0 0.0
        %856 = vmatpush1.msra.mxu0 0.0
        %857 = vmatprep.subr.mxu0 0.0
        %858 = vmatpush1.msra.mxu0 0.0
        %859 = vmatprep.subr.mxu0 0.0
        %860 = vmatpush1.msra.mxu0 0.0
        %861 = vmatprep.subr.mxu0 0.0
        %862 = vmatpush1.msra.mxu0 0.0
        %863 = vmatprep.subr.mxu0 0.0
        %864 = vmatpush1.msra.mxu0 0.0
        %865 = vmatprep.subr.mxu0 0.0
        %866 = vmatpush1.msra.mxu0 0.0
        %867 = vmatprep.subr.mxu0 0.0
        %868 = vmatpush1.msra.mxu0 0.0
        %869 = vmatprep.subr.mxu0 0.0
        %870 = vmatpush1.msra.mxu0 0.0
        %871 = vmatprep.subr.mxu0 0.0
        %872 = vmatpush1.msra.mxu0 0.0
        %873 = vmatprep.subr.mxu0 0.0
        %874 = vmatpush1.msra.mxu0 0.0
        %875 = vmatprep.subr.mxu0 0.0
        %876 = vmatpush1.msra.mxu0 0.0
        %877 = vmatprep.subr.mxu0 0.0
        %878 = vmatpush1.msra.mxu0 0.0
        %879 = vmatprep.subr.mxu0 0.0
        %880 = vmatpush1.msra.mxu0 0.0
        %881 = vmatprep.subr.mxu0 0.0
        %882 = vmatpush1.msra.mxu0 0.0
        %883 = vmatprep.subr.mxu0 0.0
        %884 = vmatpush1.msra.mxu0 0.0
        %885 = vmatprep.subr.mxu0 0.0
        %886 = vmatpush1.msra.mxu0 0.0
        %887 = vmatprep.subr.mxu0 0.0
        %888 = vmatpush1.msra.mxu0 0.0
        %889 = vmatprep.subr.mxu0 0.0
        %890 = vmatpush1.msra.mxu0 0.0
        %891 = vmatprep.subr.mxu0 0.0
        %892 = vmatpush1.msra.mxu0 0.0
        %893 = vmatprep.subr.mxu0 0.0
        %894 = vmatpush1.msra.mxu0 0.0
        %895 = vmatprep.mubr.f32.mxu0 0.0
        %896 = vmatmul.mubr.f32.gmra.mrb[0].mxu0 %v826
        %v897 = vpop.f32.mrb[0].mxu0
        %v898 = vadd.f32 %v817, %v897
        %v899 = vpop.f32.mrb[0].mxu0
        %900 = vmatprep.mubr.f32.mxu0 0.0
        %901 = vmatmul.mubr.f32.gmra.mrb[0].mxu0 %v829
        %v902 = vpop.f32.mrb[0].mxu0
        %v903 = vadd.f32 %v822, %v902
        %v904 = vpop.f32.mrb[0].mxu0
        %905 = vdwg.mxu0
        %s906 = scalar_lea.vmem %s3, 32
        %v907 = vld [vmem:[%s906] sm:$0xff]
        %v908 = vld [vmem:[%s906 + $0x8] sm:$0xff]
        %v910 = vsel %vm240, %v898, 0
        %v913 = vsel %vm240, %v903, 0
        %915 = vmatprep.subr.mxu0 0.0
        %916 = vmatpush1.msra.mxu0 %v907
        %917 = vmatprep.subr.mxu0 0.0
        %918 = vmatpush1.msra.mxu0 %v908
        %919 = vmatprep.subr.mxu0 0.0
        %920 = vmatpush1.msra.mxu0 0.0
        %921 = vmatprep.subr.mxu0 0.0
        %922 = vmatpush1.msra.mxu0 0.0
        %923 = vmatprep.subr.mxu0 0.0
        %924 = vmatpush1.msra.mxu0 0.0
        %925 = vmatprep.subr.mxu0 0.0
        %926 = vmatpush1.msra.mxu0 0.0
        %927 = vmatprep.subr.mxu0 0.0
        %928 = vmatpush1.msra.mxu0 0.0
        %929 = vmatprep.subr.mxu0 0.0
        %930 = vmatpush1.msra.mxu0 0.0
        %931 = vmatprep.subr.mxu0 0.0
        %932 = vmatpush1.msra.mxu0 0.0
        %933 = vmatprep.subr.mxu0 0.0
        %934 = vmatpush1.msra.mxu0 0.0
        %935 = vmatprep.subr.mxu0 0.0
        %936 = vmatpush1.msra.mxu0 0.0
        %937 = vmatprep.subr.mxu0 0.0
        %938 = vmatpush1.msra.mxu0 0.0
        %939 = vmatprep.subr.mxu0 0.0
        %940 = vmatpush1.msra.mxu0 0.0
        %941 = vmatprep.subr.mxu0 0.0
        %942 = vmatpush1.msra.mxu0 0.0
        %943 = vmatprep.subr.mxu0 0.0
        %944 = vmatpush1.msra.mxu0 0.0
        %945 = vmatprep.subr.mxu0 0.0
        %946 = vmatpush1.msra.mxu0 0.0
        %947 = vmatprep.subr.mxu0 0.0
        %948 = vmatpush1.msra.mxu0 0.0
        %949 = vmatprep.subr.mxu0 0.0
        %950 = vmatpush1.msra.mxu0 0.0
        %951 = vmatprep.subr.mxu0 0.0
        %952 = vmatpush1.msra.mxu0 0.0
        %953 = vmatprep.subr.mxu0 0.0
        %954 = vmatpush1.msra.mxu0 0.0
        %955 = vmatprep.subr.mxu0 0.0
        %956 = vmatpush1.msra.mxu0 0.0
        %957 = vmatprep.subr.mxu0 0.0
        %958 = vmatpush1.msra.mxu0 0.0
        %959 = vmatprep.subr.mxu0 0.0
        %960 = vmatpush1.msra.mxu0 0.0
        %961 = vmatprep.subr.mxu0 0.0
        %962 = vmatpush1.msra.mxu0 0.0
        %963 = vmatprep.subr.mxu0 0.0
        %964 = vmatpush1.msra.mxu0 0.0
        %965 = vmatprep.subr.mxu0 0.0
        %966 = vmatpush1.msra.mxu0 0.0
        %967 = vmatprep.subr.mxu0 0.0
        %968 = vmatpush1.msra.mxu0 0.0
        %969 = vmatprep.subr.mxu0 0.0
        %970 = vmatpush1.msra.mxu0 0.0
        %971 = vmatprep.subr.mxu0 0.0
        %972 = vmatpush1.msra.mxu0 0.0
        %973 = vmatprep.subr.mxu0 0.0
        %974 = vmatpush1.msra.mxu0 0.0
        %975 = vmatprep.subr.mxu0 0.0
        %976 = vmatpush1.msra.mxu0 0.0
        %977 = vmatprep.subr.mxu0 0.0
        %978 = vmatpush1.msra.mxu0 0.0
        %979 = vmatprep.mubr.f32.mxu0 0.0
        %980 = vmatmul.mubr.f32.gmra.mrb[0].mxu0 %v910
        %v981 = vpop.f32.mrb[0].mxu0
        %v982 = vadd.f32 0.0, %v981
        %v983 = vpop.f32.mrb[0].mxu0
        %984 = vmatprep.mubr.f32.mxu0 0.0
        %985 = vmatmul.mubr.f32.gmra.mrb[0].mxu0 %v913
        %v986 = vpop.f32.mrb[0].mxu0
        %v987 = vadd.f32 0.0, %v986
        %v988 = vpop.f32.mrb[0].mxu0
        %989 = vdwg.mxu0
        %v990 = vadd.f32 %v730, %v982
        %v991 = vadd.f32 %v735, %v987
        %s992 = scalar_lea.vmem %s1, 48
        %v993 = vld [vmem:[%s992] sm:$0xff]
        %v994 = vld [vmem:[%s992 + $0x8] sm:$0xff]
        %s995 = scalar_lea.vmem %s2, 48
        %v996 = vld [vmem:[%s995] sm:$0xff]
        %v997 = vld [vmem:[%s995 + $0x8] sm:$0xff]
        %v999 = vsel %vm240, %v996, 0
        %v1002 = vsel %vm240, %v997, 0
        %1004 = vmatprep.subr.mxu0 0.0
        %1005 = vmatpush1.msra.mxu0 %v234
        %1006 = vmatprep.subr.mxu0 0.0
        %1007 = vmatpush1.msra.mxu0 %v235
        %1008 = vmatprep.subr.mxu0 0.0
        %1009 = vmatpush1.msra.mxu0 0.0
        %1010 = vmatprep.subr.mxu0 0.0
        %1011 = vmatpush1.msra.mxu0 0.0
        %1012 = vmatprep.subr.mxu0 0.0
        %1013 = vmatpush1.msra.mxu0 0.0
        %1014 = vmatprep.subr.mxu0 0.0
        %1015 = vmatpush1.msra.mxu0 0.0
        %1016 = vmatprep.subr.mxu0 0.0
        %1017 = vmatpush1.msra.mxu0 0.0
        %1018 = vmatprep.subr.mxu0 0.0
        %1019 = vmatpush1.msra.mxu0 0.0
        %1020 = vmatprep.subr.mxu0 0.0
        %1021 = vmatpush1.msra.mxu0 0.0
        %1022 = vmatprep.subr.mxu0 0.0
        %1023 = vmatpush1.msra.mxu0 0.0
        %1024 = vmatprep.subr.mxu0 0.0
        %1025 = vmatpush1.msra.mxu0 0.0
        %1026 = vmatprep.subr.mxu0 0.0
        %1027 = vmatpush1.msra.mxu0 0.0
        %1028 = vmatprep.subr.mxu0 0.0
        %1029 = vmatpush1.msra.mxu0 0.0
        %1030 = vmatprep.subr.mxu0 0.0
        %1031 = vmatpush1.msra.mxu0 0.0
        %1032 = vmatprep.subr.mxu0 0.0
        %1033 = vmatpush1.msra.mxu0 0.0
        %1034 = vmatprep.subr.mxu0 0.0
        %1035 = vmatpush1.msra.mxu0 0.0
        %1036 = vmatprep.subr.mxu0 0.0
        %1037 = vmatpush1.msra.mxu0 0.0
        %1038 = vmatprep.subr.mxu0 0.0
        %1039 = vmatpush1.msra.mxu0 0.0
        %1040 = vmatprep.subr.mxu0 0.0
        %1041 = vmatpush1.msra.mxu0 0.0
        %1042 = vmatprep.subr.mxu0 0.0
        %1043 = vmatpush1.msra.mxu0 0.0
        %1044 = vmatprep.subr.mxu0 0.0
        %1045 = vmatpush1.msra.mxu0 0.0
        %1046 = vmatprep.subr.mxu0 0.0
        %1047 = vmatpush1.msra.mxu0 0.0
        %1048 = vmatprep.subr.mxu0 0.0
        %1049 = vmatpush1.msra.mxu0 0.0
        %1050 = vmatprep.subr.mxu0 0.0
        %1051 = vmatpush1.msra.mxu0 0.0
        %1052 = vmatprep.subr.mxu0 0.0
        %1053 = vmatpush1.msra.mxu0 0.0
        %1054 = vmatprep.subr.mxu0 0.0
        %1055 = vmatpush1.msra.mxu0 0.0
        %1056 = vmatprep.subr.mxu0 0.0
        %1057 = vmatpush1.msra.mxu0 0.0
        %1058 = vmatprep.subr.mxu0 0.0
        %1059 = vmatpush1.msra.mxu0 0.0
        %1060 = vmatprep.subr.mxu0 0.0
        %1061 = vmatpush1.msra.mxu0 0.0
        %1062 = vmatprep.subr.mxu0 0.0
        %1063 = vmatpush1.msra.mxu0 0.0
        %1064 = vmatprep.subr.mxu0 0.0
        %1065 = vmatpush1.msra.mxu0 0.0
        %1066 = vmatprep.subr.mxu0 0.0
        %1067 = vmatpush1.msra.mxu0 0.0
        %1068 = vmatprep.mubr.f32.mxu0 0.0
        %1069 = vmatmul.mubr.f32.gmra.mrb[0].mxu0 %v999
        %v1070 = vpop.f32.mrb[0].mxu0
        %v1071 = vadd.f32 0.0, %v1070
        %v1072 = vpop.f32.mrb[0].mxu0
        %1073 = vmatprep.mubr.f32.mxu0 0.0
        %1074 = vmatmul.mubr.f32.gmra.mrb[0].mxu0 %v1002
        %v1075 = vpop.f32.mrb[0].mxu0
        %v1076 = vadd.f32 0.0, %v1075
        %v1077 = vpop.f32.mrb[0].mxu0
        %1078 = vdwg.mxu0
        %v1080 = vsel %vm240, %v993, 0
        %v1083 = vsel %vm240, %v994, 0
        %1085 = vmatprep.subr.mxu0 0.0
        %1086 = vmatpush1.msra.mxu0 %v222
        %1087 = vmatprep.subr.mxu0 0.0
        %1088 = vmatpush1.msra.mxu0 %v223
        %1089 = vmatprep.subr.mxu0 0.0
        %1090 = vmatpush1.msra.mxu0 0.0
        %1091 = vmatprep.subr.mxu0 0.0
        %1092 = vmatpush1.msra.mxu0 0.0
        %1093 = vmatprep.subr.mxu0 0.0
        %1094 = vmatpush1.msra.mxu0 0.0
        %1095 = vmatprep.subr.mxu0 0.0
        %1096 = vmatpush1.msra.mxu0 0.0
        %1097 = vmatprep.subr.mxu0 0.0
        %1098 = vmatpush1.msra.mxu0 0.0
        %1099 = vmatprep.subr.mxu0 0.0
        %1100 = vmatpush1.msra.mxu0 0.0
        %1101 = vmatprep.subr.mxu0 0.0
        %1102 = vmatpush1.msra.mxu0 0.0
        %1103 = vmatprep.subr.mxu0 0.0
        %1104 = vmatpush1.msra.mxu0 0.0
        %1105 = vmatprep.subr.mxu0 0.0
        %1106 = vmatpush1.msra.mxu0 0.0
        %1107 = vmatprep.subr.mxu0 0.0
        %1108 = vmatpush1.msra.mxu0 0.0
        %1109 = vmatprep.subr.mxu0 0.0
        %1110 = vmatpush1.msra.mxu0 0.0
        %1111 = vmatprep.subr.mxu0 0.0
        %1112 = vmatpush1.msra.mxu0 0.0
        %1113 = vmatprep.subr.mxu0 0.0
        %1114 = vmatpush1.msra.mxu0 0.0
        %1115 = vmatprep.subr.mxu0 0.0
        %1116 = vmatpush1.msra.mxu0 0.0
        %1117 = vmatprep.subr.mxu0 0.0
        %1118 = vmatpush1.msra.mxu0 0.0
        %1119 = vmatprep.subr.mxu0 0.0
        %1120 = vmatpush1.msra.mxu0 0.0
        %1121 = vmatprep.subr.mxu0 0.0
        %1122 = vmatpush1.msra.mxu0 0.0
        %1123 = vmatprep.subr.mxu0 0.0
        %1124 = vmatpush1.msra.mxu0 0.0
        %1125 = vmatprep.subr.mxu0 0.0
        %1126 = vmatpush1.msra.mxu0 0.0
        %1127 = vmatprep.subr.mxu0 0.0
        %1128 = vmatpush1.msra.mxu0 0.0
        %1129 = vmatprep.subr.mxu0 0.0
        %1130 = vmatpush1.msra.mxu0 0.0
        %1131 = vmatprep.subr.mxu0 0.0
        %1132 = vmatpush1.msra.mxu0 0.0
        %1133 = vmatprep.subr.mxu0 0.0
        %1134 = vmatpush1.msra.mxu0 0.0
        %1135 = vmatprep.subr.mxu0 0.0
        %1136 = vmatpush1.msra.mxu0 0.0
        %1137 = vmatprep.subr.mxu0 0.0
        %1138 = vmatpush1.msra.mxu0 0.0
        %1139 = vmatprep.subr.mxu0 0.0
        %1140 = vmatpush1.msra.mxu0 0.0
        %1141 = vmatprep.subr.mxu0 0.0
        %1142 = vmatpush1.msra.mxu0 0.0
        %1143 = vmatprep.subr.mxu0 0.0
        %1144 = vmatpush1.msra.mxu0 0.0
        %1145 = vmatprep.subr.mxu0 0.0
        %1146 = vmatpush1.msra.mxu0 0.0
        %1147 = vmatprep.subr.mxu0 0.0
        %1148 = vmatpush1.msra.mxu0 0.0
        %1149 = vmatprep.mubr.f32.mxu0 0.0
        %1150 = vmatmul.mubr.f32.gmra.mrb[0].mxu0 %v1080
        %v1151 = vpop.f32.mrb[0].mxu0
        %v1152 = vadd.f32 %v1071, %v1151
        %v1153 = vpop.f32.mrb[0].mxu0
        %1154 = vmatprep.mubr.f32.mxu0 0.0
        %1155 = vmatmul.mubr.f32.gmra.mrb[0].mxu0 %v1083
        %v1156 = vpop.f32.mrb[0].mxu0
        %v1157 = vadd.f32 %v1076, %v1156
        %v1158 = vpop.f32.mrb[0].mxu0
        %1159 = vdwg.mxu0
        %s1160 = scalar_lea.vmem %s3, 48
        %v1161 = vld [vmem:[%s1160] sm:$0xff]
        %v1162 = vld [vmem:[%s1160 + $0x8] sm:$0xff]
        %v1164 = vsel %vm240, %v1152, 0
        %v1167 = vsel %vm240, %v1157, 0
        %1169 = vmatprep.subr.mxu0 0.0
        %1170 = vmatpush1.msra.mxu0 %v1161
        %1171 = vmatprep.subr.mxu0 0.0
        %1172 = vmatpush1.msra.mxu0 %v1162
        %1173 = vmatprep.subr.mxu0 0.0
        %1174 = vmatpush1.msra.mxu0 0.0
        %1175 = vmatprep.subr.mxu0 0.0
        %1176 = vmatpush1.msra.mxu0 0.0
        %1177 = vmatprep.subr.mxu0 0.0
        %1178 = vmatpush1.msra.mxu0 0.0
        %1179 = vmatprep.subr.mxu0 0.0
        %1180 = vmatpush1.msra.mxu0 0.0
        %1181 = vmatprep.subr.mxu0 0.0
        %1182 = vmatpush1.msra.mxu0 0.0
        %1183 = vmatprep.subr.mxu0 0.0
        %1184 = vmatpush1.msra.mxu0 0.0
        %1185 = vmatprep.subr.mxu0 0.0
        %1186 = vmatpush1.msra.mxu0 0.0
        %1187 = vmatprep.subr.mxu0 0.0
        %1188 = vmatpush1.msra.mxu0 0.0
        %1189 = vmatprep.subr.mxu0 0.0
        %1190 = vmatpush1.msra.mxu0 0.0
        %1191 = vmatprep.subr.mxu0 0.0
        %1192 = vmatpush1.msra.mxu0 0.0
        %1193 = vmatprep.subr.mxu0 0.0
        %1194 = vmatpush1.msra.mxu0 0.0
        %1195 = vmatprep.subr.mxu0 0.0
        %1196 = vmatpush1.msra.mxu0 0.0
        %1197 = vmatprep.subr.mxu0 0.0
        %1198 = vmatpush1.msra.mxu0 0.0
        %1199 = vmatprep.subr.mxu0 0.0
        %1200 = vmatpush1.msra.mxu0 0.0
        %1201 = vmatprep.subr.mxu0 0.0
        %1202 = vmatpush1.msra.mxu0 0.0
        %1203 = vmatprep.subr.mxu0 0.0
        %1204 = vmatpush1.msra.mxu0 0.0
        %1205 = vmatprep.subr.mxu0 0.0
        %1206 = vmatpush1.msra.mxu0 0.0
        %1207 = vmatprep.subr.mxu0 0.0
        %1208 = vmatpush1.msra.mxu0 0.0
        %1209 = vmatprep.subr.mxu0 0.0
        %1210 = vmatpush1.msra.mxu0 0.0
        %1211 = vmatprep.subr.mxu0 0.0
        %1212 = vmatpush1.msra.mxu0 0.0
        %1213 = vmatprep.subr.mxu0 0.0
        %1214 = vmatpush1.msra.mxu0 0.0
        %1215 = vmatprep.subr.mxu0 0.0
        %1216 = vmatpush1.msra.mxu0 0.0
        %1217 = vmatprep.subr.mxu0 0.0
        %1218 = vmatpush1.msra.mxu0 0.0
        %1219 = vmatprep.subr.mxu0 0.0
        %1220 = vmatpush1.msra.mxu0 0.0
        %1221 = vmatprep.subr.mxu0 0.0
        %1222 = vmatpush1.msra.mxu0 0.0
        %1223 = vmatprep.subr.mxu0 0.0
        %1224 = vmatpush1.msra.mxu0 0.0
        %1225 = vmatprep.subr.mxu0 0.0
        %1226 = vmatpush1.msra.mxu0 0.0
        %1227 = vmatprep.subr.mxu0 0.0
        %1228 = vmatpush1.msra.mxu0 0.0
        %1229 = vmatprep.subr.mxu0 0.0
        %1230 = vmatpush1.msra.mxu0 0.0
        %1231 = vmatprep.subr.mxu0 0.0
        %1232 = vmatpush1.msra.mxu0 0.0
        %1233 = vmatprep.mubr.f32.mxu0 0.0
        %1234 = vmatmul.mubr.f32.gmra.mrb[0].mxu0 %v1164
        %v1235 = vpop.f32.mrb[0].mxu0
        %v1236 = vadd.f32 0.0, %v1235
        %v1237 = vpop.f32.mrb[0].mxu0
        %1238 = vmatprep.mubr.f32.mxu0 0.0
        %1239 = vmatmul.mubr.f32.gmra.mrb[0].mxu0 %v1167
        %v1240 = vpop.f32.mrb[0].mxu0
        %v1241 = vadd.f32 0.0, %v1240
        %v1242 = vpop.f32.mrb[0].mxu0
        %1243 = vdwg.mxu0
        %v1244 = vadd.f32 %v990, %v1236
        %v1245 = vadd.f32 %v991, %v1241
        %s1246 = scalar_lea.vmem %s1, 64
        %v1247 = vld [vmem:[%s1246] sm:$0xff]
        %v1248 = vld [vmem:[%s1246 + $0x8] sm:$0xff]
        %s1249 = scalar_lea.vmem %s2, 64
        %v1250 = vld [vmem:[%s1249] sm:$0xff]
        %v1251 = vld [vmem:[%s1249 + $0x8] sm:$0xff]
        %v1253 = vsel %vm240, %v1250, 0
        %v1256 = vsel %vm240, %v1251, 0
        %1258 = vmatprep.subr.mxu0 0.0
        %1259 = vmatpush1.msra.mxu0 %v234
        %1260 = vmatprep.subr.mxu0 0.0
        %1261 = vmatpush1.msra.mxu0 %v235
        %1262 = vmatprep.subr.mxu0 0.0
        %1263 = vmatpush1.msra.mxu0 0.0
        %1264 = vmatprep.subr.mxu0 0.0
        %1265 = vmatpush1.msra.mxu0 0.0
        %1266 = vmatprep.subr.mxu0 0.0
        %1267 = vmatpush1.msra.mxu0 0.0
        %1268 = vmatprep.subr.mxu0 0.0
        %1269 = vmatpush1.msra.mxu0 0.0
        %1270 = vmatprep.subr.mxu0 0.0
        %1271 = vmatpush1.msra.mxu0 0.0
        %1272 = vmatprep.subr.mxu0 0.0
        %1273 = vmatpush1.msra.mxu0 0.0
        %1274 = vmatprep.subr.mxu0 0.0
        %1275 = vmatpush1.msra.mxu0 0.0
        %1276 = vmatprep.subr.mxu0 0.0
        %1277 = vmatpush1.msra.mxu0 0.0
        %1278 = vmatprep.subr.mxu0 0.0
        %1279 = vmatpush1.msra.mxu0 0.0
        %1280 = vmatprep.subr.mxu0 0.0
        %1281 = vmatpush1.msra.mxu0 0.0
        %1282 = vmatprep.subr.mxu0 0.0
        %1283 = vmatpush1.msra.mxu0 0.0
        %1284 = vmatprep.subr.mxu0 0.0
        %1285 = vmatpush1.msra.mxu0 0.0
        %1286 = vmatprep.subr.mxu0 0.0
        %1287 = vmatpush1.msra.mxu0 0.0
        %1288 = vmatprep.subr.mxu0 0.0
        %1289 = vmatpush1.msra.mxu0 0.0
        %1290 = vmatprep.subr.mxu0 0.0
        %1291 = vmatpush1.msra.mxu0 0.0
        %1292 = vmatprep.subr.mxu0 0.0
        %1293 = vmatpush1.msra.mxu0 0.0
        %1294 = vmatprep.subr.mxu0 0.0
        %1295 = vmatpush1.msra.mxu0 0.0
        %1296 = vmatprep.subr.mxu0 0.0
        %1297 = vmatpush1.msra.mxu0 0.0
        %1298 = vmatprep.subr.mxu0 0.0
        %1299 = vmatpush1.msra.mxu0 0.0
        %1300 = vmatprep.subr.mxu0 0.0
        %1301 = vmatpush1.msra.mxu0 0.0
        %1302 = vmatprep.subr.mxu0 0.0
        %1303 = vmatpush1.msra.mxu0 0.0
        %1304 = vmatprep.subr.mxu0 0.0
        %1305 = vmatpush1.msra.mxu0 0.0
        %1306 = vmatprep.subr.mxu0 0.0
        %1307 = vmatpush1.msra.mxu0 0.0
        %1308 = vmatprep.subr.mxu0 0.0
        %1309 = vmatpush1.msra.mxu0 0.0
        %1310 = vmatprep.subr.mxu0 0.0
        %1311 = vmatpush1.msra.mxu0 0.0
        %1312 = vmatprep.subr.mxu0 0.0
        %1313 = vmatpush1.msra.mxu0 0.0
        %1314 = vmatprep.subr.mxu0 0.0
        %1315 = vmatpush1.msra.mxu0 0.0
        %1316 = vmatprep.subr.mxu0 0.0
        %1317 = vmatpush1.msra.mxu0 0.0
        %1318 = vmatprep.subr.mxu0 0.0
        %1319 = vmatpush1.msra.mxu0 0.0
        %1320 = vmatprep.subr.mxu0 0.0
        %1321 = vmatpush1.msra.mxu0 0.0
        %1322 = vmatprep.mubr.f32.mxu0 0.0
        %1323 = vmatmul.mubr.f32.gmra.mrb[0].mxu0 %v1253
        %v1324 = vpop.f32.mrb[0].mxu0
        %v1325 = vadd.f32 0.0, %v1324
        %v1326 = vpop.f32.mrb[0].mxu0
        %1327 = vmatprep.mubr.f32.mxu0 0.0
        %1328 = vmatmul.mubr.f32.gmra.mrb[0].mxu0 %v1256
        %v1329 = vpop.f32.mrb[0].mxu0
        %v1330 = vadd.f32 0.0, %v1329
        %v1331 = vpop.f32.mrb[0].mxu0
        %1332 = vdwg.mxu0
        %v1334 = vsel %vm240, %v1247, 0
        %v1337 = vsel %vm240, %v1248, 0
        %1339 = vmatprep.subr.mxu0 0.0
        %1340 = vmatpush1.msra.mxu0 %v222
        %1341 = vmatprep.subr.mxu0 0.0
        %1342 = vmatpush1.msra.mxu0 %v223
        %1343 = vmatprep.subr.mxu0 0.0
        %1344 = vmatpush1.msra.mxu0 0.0
        %1345 = vmatprep.subr.mxu0 0.0
        %1346 = vmatpush1.msra.mxu0 0.0
        %1347 = vmatprep.subr.mxu0 0.0
        %1348 = vmatpush1.msra.mxu0 0.0
        %1349 = vmatprep.subr.mxu0 0.0
        %1350 = vmatpush1.msra.mxu0 0.0
        %1351 = vmatprep.subr.mxu0 0.0
        %1352 = vmatpush1.msra.mxu0 0.0
        %1353 = vmatprep.subr.mxu0 0.0
        %1354 = vmatpush1.msra.mxu0 0.0
        %1355 = vmatprep.subr.mxu0 0.0
        %1356 = vmatpush1.msra.mxu0 0.0
        %1357 = vmatprep.subr.mxu0 0.0
        %1358 = vmatpush1.msra.mxu0 0.0
        %1359 = vmatprep.subr.mxu0 0.0
        %1360 = vmatpush1.msra.mxu0 0.0
        %1361 = vmatprep.subr.mxu0 0.0
        %1362 = vmatpush1.msra.mxu0 0.0
        %1363 = vmatprep.subr.mxu0 0.0
        %1364 = vmatpush1.msra.mxu0 0.0
        %1365 = vmatprep.subr.mxu0 0.0
        %1366 = vmatpush1.msra.mxu0 0.0
        %1367 = vmatprep.subr.mxu0 0.0
        %1368 = vmatpush1.msra.mxu0 0.0
        %1369 = vmatprep.subr.mxu0 0.0
        %1370 = vmatpush1.msra.mxu0 0.0
        %1371 = vmatprep.subr.mxu0 0.0
        %1372 = vmatpush1.msra.mxu0 0.0
        %1373 = vmatprep.subr.mxu0 0.0
        %1374 = vmatpush1.msra.mxu0 0.0
        %1375 = vmatprep.subr.mxu0 0.0
        %1376 = vmatpush1.msra.mxu0 0.0
        %1377 = vmatprep.subr.mxu0 0.0
        %1378 = vmatpush1.msra.mxu0 0.0
        %1379 = vmatprep.subr.mxu0 0.0
        %1380 = vmatpush1.msra.mxu0 0.0
        %1381 = vmatprep.subr.mxu0 0.0
        %1382 = vmatpush1.msra.mxu0 0.0
        %1383 = vmatprep.subr.mxu0 0.0
        %1384 = vmatpush1.msra.mxu0 0.0
        %1385 = vmatprep.subr.mxu0 0.0
        %1386 = vmatpush1.msra.mxu0 0.0
        %1387 = vmatprep.subr.mxu0 0.0
        %1388 = vmatpush1.msra.mxu0 0.0
        %1389 = vmatprep.subr.mxu0 0.0
        %1390 = vmatpush1.msra.mxu0 0.0
        %1391 = vmatprep.subr.mxu0 0.0
        %1392 = vmatpush1.msra.mxu0 0.0
        %1393 = vmatprep.subr.mxu0 0.0
        %1394 = vmatpush1.msra.mxu0 0.0
        %1395 = vmatprep.subr.mxu0 0.0
        %1396 = vmatpush1.msra.mxu0 0.0
        %1397 = vmatprep.subr.mxu0 0.0
        %1398 = vmatpush1.msra.mxu0 0.0
        %1399 = vmatprep.subr.mxu0 0.0
        %1400 = vmatpush1.msra.mxu0 0.0
        %1401 = vmatprep.subr.mxu0 0.0
        %1402 = vmatpush1.msra.mxu0 0.0
        %1403 = vmatprep.mubr.f32.mxu0 0.0
        %1404 = vmatmul.mubr.f32.gmra.mrb[0].mxu0 %v1334
        %v1405 = vpop.f32.mrb[0].mxu0
        %v1406 = vadd.f32 %v1325, %v1405
        %v1407 = vpop.f32.mrb[0].mxu0
        %1408 = vmatprep.mubr.f32.mxu0 0.0
        %1409 = vmatmul.mubr.f32.gmra.mrb[0].mxu0 %v1337
        %v1410 = vpop.f32.mrb[0].mxu0
        %v1411 = vadd.f32 %v1330, %v1410
        %v1412 = vpop.f32.mrb[0].mxu0
        %1413 = vdwg.mxu0
        %s1414 = scalar_lea.vmem %s3, 64
        %v1415 = vld [vmem:[%s1414] sm:$0xff]
        %v1416 = vld [vmem:[%s1414 + $0x8] sm:$0xff]
        %v1418 = vsel %vm240, %v1406, 0
        %v1421 = vsel %vm240, %v1411, 0
        %1423 = vmatprep.subr.mxu0 0.0
        %1424 = vmatpush1.msra.mxu0 %v1415
        %1425 = vmatprep.subr.mxu0 0.0
        %1426 = vmatpush1.msra.mxu0 %v1416
        %1427 = vmatprep.subr.mxu0 0.0
        %1428 = vmatpush1.msra.mxu0 0.0
        %1429 = vmatprep.subr.mxu0 0.0
        %1430 = vmatpush1.msra.mxu0 0.0
        %1431 = vmatprep.subr.mxu0 0.0
        %1432 = vmatpush1.msra.mxu0 0.0
        %1433 = vmatprep.subr.mxu0 0.0
        %1434 = vmatpush1.msra.mxu0 0.0
        %1435 = vmatprep.subr.mxu0 0.0
        %1436 = vmatpush1.msra.mxu0 0.0
        %1437 = vmatprep.subr.mxu0 0.0
        %1438 = vmatpush1.msra.mxu0 0.0
        %1439 = vmatprep.subr.mxu0 0.0
        %1440 = vmatpush1.msra.mxu0 0.0
        %1441 = vmatprep.subr.mxu0 0.0
        %1442 = vmatpush1.msra.mxu0 0.0
        %1443 = vmatprep.subr.mxu0 0.0
        %1444 = vmatpush1.msra.mxu0 0.0
        %1445 = vmatprep.subr.mxu0 0.0
        %1446 = vmatpush1.msra.mxu0 0.0
        %1447 = vmatprep.subr.mxu0 0.0
        %1448 = vmatpush1.msra.mxu0 0.0
        %1449 = vmatprep.subr.mxu0 0.0
        %1450 = vmatpush1.msra.mxu0 0.0
        %1451 = vmatprep.subr.mxu0 0.0
        %1452 = vmatpush1.msra.mxu0 0.0
        %1453 = vmatprep.subr.mxu0 0.0
        %1454 = vmatpush1.msra.mxu0 0.0
        %1455 = vmatprep.subr.mxu0 0.0
        %1456 = vmatpush1.msra.mxu0 0.0
        %1457 = vmatprep.subr.mxu0 0.0
        %1458 = vmatpush1.msra.mxu0 0.0
        %1459 = vmatprep.subr.mxu0 0.0
        %1460 = vmatpush1.msra.mxu0 0.0
        %1461 = vmatprep.subr.mxu0 0.0
        %1462 = vmatpush1.msra.mxu0 0.0
        %1463 = vmatprep.subr.mxu0 0.0
        %1464 = vmatpush1.msra.mxu0 0.0
        %1465 = vmatprep.subr.mxu0 0.0
        %1466 = vmatpush1.msra.mxu0 0.0
        %1467 = vmatprep.subr.mxu0 0.0
        %1468 = vmatpush1.msra.mxu0 0.0
        %1469 = vmatprep.subr.mxu0 0.0
        %1470 = vmatpush1.msra.mxu0 0.0
        %1471 = vmatprep.subr.mxu0 0.0
        %1472 = vmatpush1.msra.mxu0 0.0
        %1473 = vmatprep.subr.mxu0 0.0
        %1474 = vmatpush1.msra.mxu0 0.0
        %1475 = vmatprep.subr.mxu0 0.0
        %1476 = vmatpush1.msra.mxu0 0.0
        %1477 = vmatprep.subr.mxu0 0.0
        %1478 = vmatpush1.msra.mxu0 0.0
        %1479 = vmatprep.subr.mxu0 0.0
        %1480 = vmatpush1.msra.mxu0 0.0
        %1481 = vmatprep.subr.mxu0 0.0
        %1482 = vmatpush1.msra.mxu0 0.0
        %1483 = vmatprep.subr.mxu0 0.0
        %1484 = vmatpush1.msra.mxu0 0.0
        %1485 = vmatprep.subr.mxu0 0.0
        %1486 = vmatpush1.msra.mxu0 0.0
        %1487 = vmatprep.mubr.f32.mxu0 0.0
        %1488 = vmatmul.mubr.f32.gmra.mrb[0].mxu0 %v1418
        %v1489 = vpop.f32.mrb[0].mxu0
        %v1490 = vadd.f32 0.0, %v1489
        %v1491 = vpop.f32.mrb[0].mxu0
        %1492 = vmatprep.mubr.f32.mxu0 0.0
        %1493 = vmatmul.mubr.f32.gmra.mrb[0].mxu0 %v1421
        %v1494 = vpop.f32.mrb[0].mxu0
        %v1495 = vadd.f32 0.0, %v1494
        %v1496 = vpop.f32.mrb[0].mxu0
        %1497 = vdwg.mxu0
        %v1498 = vadd.f32 %v1244, %v1490
        %v1499 = vadd.f32 %v1245, %v1495
        %s1500 = scalar_lea.vmem %s1, 80
        %v1501 = vld [vmem:[%s1500] sm:$0xff]
        %v1502 = vld [vmem:[%s1500 + $0x8] sm:$0xff]
        %s1503 = scalar_lea.vmem %s2, 80
        %v1504 = vld [vmem:[%s1503] sm:$0xff]
        %v1505 = vld [vmem:[%s1503 + $0x8] sm:$0xff]
        %v1507 = vsel %vm240, %v1504, 0
        %v1510 = vsel %vm240, %v1505, 0
        %1512 = vmatprep.subr.mxu0 0.0
        %1513 = vmatpush1.msra.mxu0 %v234
        %1514 = vmatprep.subr.mxu0 0.0
        %1515 = vmatpush1.msra.mxu0 %v235
        %1516 = vmatprep.subr.mxu0 0.0
        %1517 = vmatpush1.msra.mxu0 0.0
        %1518 = vmatprep.subr.mxu0 0.0
        %1519 = vmatpush1.msra.mxu0 0.0
        %1520 = vmatprep.subr.mxu0 0.0
        %1521 = vmatpush1.msra.mxu0 0.0
        %1522 = vmatprep.subr.mxu0 0.0
        %1523 = vmatpush1.msra.mxu0 0.0
        %1524 = vmatprep.subr.mxu0 0.0
        %1525 = vmatpush1.msra.mxu0 0.0
        %1526 = vmatprep.subr.mxu0 0.0
        %1527 = vmatpush1.msra.mxu0 0.0
        %1528 = vmatprep.subr.mxu0 0.0
        %1529 = vmatpush1.msra.mxu0 0.0
        %1530 = vmatprep.subr.mxu0 0.0
        %1531 = vmatpush1.msra.mxu0 0.0
        %1532 = vmatprep.subr.mxu0 0.0
        %1533 = vmatpush1.msra.mxu0 0.0
        %1534 = vmatprep.subr.mxu0 0.0
        %1535 = vmatpush1.msra.mxu0 0.0
        %1536 = vmatprep.subr.mxu0 0.0
        %1537 = vmatpush1.msra.mxu0 0.0
        %1538 = vmatprep.subr.mxu0 0.0
        %1539 = vmatpush1.msra.mxu0 0.0
        %1540 = vmatprep.subr.mxu0 0.0
        %1541 = vmatpush1.msra.mxu0 0.0
        %1542 = vmatprep.subr.mxu0 0.0
        %1543 = vmatpush1.msra.mxu0 0.0
        %1544 = vmatprep.subr.mxu0 0.0
        %1545 = vmatpush1.msra.mxu0 0.0
        %1546 = vmatprep.subr.mxu0 0.0
        %1547 = vmatpush1.msra.mxu0 0.0
        %1548 = vmatprep.subr.mxu0 0.0
        %1549 = vmatpush1.msra.mxu0 0.0
        %1550 = vmatprep.subr.mxu0 0.0
        %1551 = vmatpush1.msra.mxu0 0.0
        %1552 = vmatprep.subr.mxu0 0.0
        %1553 = vmatpush1.msra.mxu0 0.0
        %1554 = vmatprep.subr.mxu0 0.0
        %1555 = vmatpush1.msra.mxu0 0.0
        %1556 = vmatprep.subr.mxu0 0.0
        %1557 = vmatpush1.msra.mxu0 0.0
        %1558 = vmatprep.subr.mxu0 0.0
        %1559 = vmatpush1.msra.mxu0 0.0
        %1560 = vmatprep.subr.mxu0 0.0
        %1561 = vmatpush1.msra.mxu0 0.0
        %1562 = vmatprep.subr.mxu0 0.0
        %1563 = vmatpush1.msra.mxu0 0.0
        %1564 = vmatprep.subr.mxu0 0.0
        %1565 = vmatpush1.msra.mxu0 0.0
        %1566 = vmatprep.subr.mxu0 0.0
        %1567 = vmatpush1.msra.mxu0 0.0
        %1568 = vmatprep.subr.mxu0 0.0
        %1569 = vmatpush1.msra.mxu0 0.0
        %1570 = vmatprep.subr.mxu0 0.0
        %1571 = vmatpush1.msra.mxu0 0.0
        %1572 = vmatprep.subr.mxu0 0.0
        %1573 = vmatpush1.msra.mxu0 0.0
        %1574 = vmatprep.subr.mxu0 0.0
        %1575 = vmatpush1.msra.mxu0 0.0
        %1576 = vmatprep.mubr.f32.mxu0 0.0
        %1577 = vmatmul.mubr.f32.gmra.mrb[0].mxu0 %v1507
        %v1578 = vpop.f32.mrb[0].mxu0
        %v1579 = vadd.f32 0.0, %v1578
        %v1580 = vpop.f32.mrb[0].mxu0
        %1581 = vmatprep.mubr.f32.mxu0 0.0
        %1582 = vmatmul.mubr.f32.gmra.mrb[0].mxu0 %v1510
        %v1583 = vpop.f32.mrb[0].mxu0
        %v1584 = vadd.f32 0.0, %v1583
        %v1585 = vpop.f32.mrb[0].mxu0
        %1586 = vdwg.mxu0
        %v1588 = vsel %vm240, %v1501, 0
        %v1591 = vsel %vm240, %v1502, 0
        %1593 = vmatprep.subr.mxu0 0.0
        %1594 = vmatpush1.msra.mxu0 %v222
        %1595 = vmatprep.subr.mxu0 0.0
        %1596 = vmatpush1.msra.mxu0 %v223
        %1597 = vmatprep.subr.mxu0 0.0
        %1598 = vmatpush1.msra.mxu0 0.0
        %1599 = vmatprep.subr.mxu0 0.0
        %1600 = vmatpush1.msra.mxu0 0.0
        %1601 = vmatprep.subr.mxu0 0.0
        %1602 = vmatpush1.msra.mxu0 0.0
        %1603 = vmatprep.subr.mxu0 0.0
        %1604 = vmatpush1.msra.mxu0 0.0
        %1605 = vmatprep.subr.mxu0 0.0
        %1606 = vmatpush1.msra.mxu0 0.0
        %1607 = vmatprep.subr.mxu0 0.0
        %1608 = vmatpush1.msra.mxu0 0.0
        %1609 = vmatprep.subr.mxu0 0.0
        %1610 = vmatpush1.msra.mxu0 0.0
        %1611 = vmatprep.subr.mxu0 0.0
        %1612 = vmatpush1.msra.mxu0 0.0
        %1613 = vmatprep.subr.mxu0 0.0
        %1614 = vmatpush1.msra.mxu0 0.0
        %1615 = vmatprep.subr.mxu0 0.0
        %1616 = vmatpush1.msra.mxu0 0.0
        %1617 = vmatprep.subr.mxu0 0.0
        %1618 = vmatpush1.msra.mxu0 0.0
        %1619 = vmatprep.subr.mxu0 0.0
        %1620 = vmatpush1.msra.mxu0 0.0
        %1621 = vmatprep.subr.mxu0 0.0
        %1622 = vmatpush1.msra.mxu0 0.0
        %1623 = vmatprep.subr.mxu0 0.0
        %1624 = vmatpush1.msra.mxu0 0.0
        %1625 = vmatprep.subr.mxu0 0.0
        %1626 = vmatpush1.msra.mxu0 0.0
        %1627 = vmatprep.subr.mxu0 0.0
        %1628 = vmatpush1.msra.mxu0 0.0
        %1629 = vmatprep.subr.mxu0 0.0
        %1630 = vmatpush1.msra.mxu0 0.0
        %1631 = vmatprep.subr.mxu0 0.0
        %1632 = vmatpush1.msra.mxu0 0.0
        %1633 = vmatprep.subr.mxu0 0.0
        %1634 = vmatpush1.msra.mxu0 0.0
        %1635 = vmatprep.subr.mxu0 0.0
        %1636 = vmatpush1.msra.mxu0 0.0
        %1637 = vmatprep.subr.mxu0 0.0
        %1638 = vmatpush1.msra.mxu0 0.0
        %1639 = vmatprep.subr.mxu0 0.0
        %1640 = vmatpush1.msra.mxu0 0.0
        %1641 = vmatprep.subr.mxu0 0.0
        %1642 = vmatpush1.msra.mxu0 0.0
        %1643 = vmatprep.subr.mxu0 0.0
        %1644 = vmatpush1.msra.mxu0 0.0
        %1645 = vmatprep.subr.mxu0 0.0
        %1646 = vmatpush1.msra.mxu0 0.0
        %1647 = vmatprep.subr.mxu0 0.0
        %1648 = vmatpush1.msra.mxu0 0.0
        %1649 = vmatprep.subr.mxu0 0.0
        %1650 = vmatpush1.msra.mxu0 0.0
        %1651 = vmatprep.subr.mxu0 0.0
        %1652 = vmatpush1.msra.mxu0 0.0
        %1653 = vmatprep.subr.mxu0 0.0
        %1654 = vmatpush1.msra.mxu0 0.0
        %1655 = vmatprep.subr.mxu0 0.0
        %1656 = vmatpush1.msra.mxu0 0.0
        %1657 = vmatprep.mubr.f32.mxu0 0.0
        %1658 = vmatmul.mubr.f32.gmra.mrb[0].mxu0 %v1588
        %v1659 = vpop.f32.mrb[0].mxu0
        %v1660 = vadd.f32 %v1579, %v1659
        %v1661 = vpop.f32.mrb[0].mxu0
        %1662 = vmatprep.mubr.f32.mxu0 0.0
        %1663 = vmatmul.mubr.f32.gmra.mrb[0].mxu0 %v1591
        %v1664 = vpop.f32.mrb[0].mxu0
        %v1665 = vadd.f32 %v1584, %v1664
        %v1666 = vpop.f32.mrb[0].mxu0
        %1667 = vdwg.mxu0
        %s1668 = scalar_lea.vmem %s3, 80
        %v1669 = vld [vmem:[%s1668] sm:$0xff]
        %v1670 = vld [vmem:[%s1668 + $0x8] sm:$0xff]
        %v1672 = vsel %vm240, %v1660, 0
        %v1675 = vsel %vm240, %v1665, 0
        %1677 = vmatprep.subr.mxu0 0.0
        %1678 = vmatpush1.msra.mxu0 %v1669
        %1679 = vmatprep.subr.mxu0 0.0
        %1680 = vmatpush1.msra.mxu0 %v1670
        %1681 = vmatprep.subr.mxu0 0.0
        %1682 = vmatpush1.msra.mxu0 0.0
        %1683 = vmatprep.subr.mxu0 0.0
        %1684 = vmatpush1.msra.mxu0 0.0
        %1685 = vmatprep.subr.mxu0 0.0
        %1686 = vmatpush1.msra.mxu0 0.0
        %1687 = vmatprep.subr.mxu0 0.0
        %1688 = vmatpush1.msra.mxu0 0.0
        %1689 = vmatprep.subr.mxu0 0.0
        %1690 = vmatpush1.msra.mxu0 0.0
        %1691 = vmatprep.subr.mxu0 0.0
        %1692 = vmatpush1.msra.mxu0 0.0
        %1693 = vmatprep.subr.mxu0 0.0
        %1694 = vmatpush1.msra.mxu0 0.0
        %1695 = vmatprep.subr.mxu0 0.0
        %1696 = vmatpush1.msra.mxu0 0.0
        %1697 = vmatprep.subr.mxu0 0.0
        %1698 = vmatpush1.msra.mxu0 0.0
        %1699 = vmatprep.subr.mxu0 0.0
        %1700 = vmatpush1.msra.mxu0 0.0
        %1701 = vmatprep.subr.mxu0 0.0
        %1702 = vmatpush1.msra.mxu0 0.0
        %1703 = vmatprep.subr.mxu0 0.0
        %1704 = vmatpush1.msra.mxu0 0.0
        %1705 = vmatprep.subr.mxu0 0.0
        %1706 = vmatpush1.msra.mxu0 0.0
        %1707 = vmatprep.subr.mxu0 0.0
        %1708 = vmatpush1.msra.mxu0 0.0
        %1709 = vmatprep.subr.mxu0 0.0
        %1710 = vmatpush1.msra.mxu0 0.0
        %1711 = vmatprep.subr.mxu0 0.0
        %1712 = vmatpush1.msra.mxu0 0.0
        %1713 = vmatprep.subr.mxu0 0.0
        %1714 = vmatpush1.msra.mxu0 0.0
        %1715 = vmatprep.subr.mxu0 0.0
        %1716 = vmatpush1.msra.mxu0 0.0
        %1717 = vmatprep.subr.mxu0 0.0
        %1718 = vmatpush1.msra.mxu0 0.0
        %1719 = vmatprep.subr.mxu0 0.0
        %1720 = vmatpush1.msra.mxu0 0.0
        %1721 = vmatprep.subr.mxu0 0.0
        %1722 = vmatpush1.msra.mxu0 0.0
        %1723 = vmatprep.subr.mxu0 0.0
        %1724 = vmatpush1.msra.mxu0 0.0
        %1725 = vmatprep.subr.mxu0 0.0
        %1726 = vmatpush1.msra.mxu0 0.0
        %1727 = vmatprep.subr.mxu0 0.0
        %1728 = vmatpush1.msra.mxu0 0.0
        %1729 = vmatprep.subr.mxu0 0.0
        %1730 = vmatpush1.msra.mxu0 0.0
        %1731 = vmatprep.subr.mxu0 0.0
        %1732 = vmatpush1.msra.mxu0 0.0
        %1733 = vmatprep.subr.mxu0 0.0
        %1734 = vmatpush1.msra.mxu0 0.0
        %1735 = vmatprep.subr.mxu0 0.0
        %1736 = vmatpush1.msra.mxu0 0.0
        %1737 = vmatprep.subr.mxu0 0.0
        %1738 = vmatpush1.msra.mxu0 0.0
        %1739 = vmatprep.subr.mxu0 0.0
        %1740 = vmatpush1.msra.mxu0 0.0
        %1741 = vmatprep.mubr.f32.mxu0 0.0
        %1742 = vmatmul.mubr.f32.gmra.mrb[0].mxu0 %v1672
        %v1743 = vpop.f32.mrb[0].mxu0
        %v1744 = vadd.f32 0.0, %v1743
        %v1745 = vpop.f32.mrb[0].mxu0
        %1746 = vmatprep.mubr.f32.mxu0 0.0
        %1747 = vmatmul.mubr.f32.gmra.mrb[0].mxu0 %v1675
        %v1748 = vpop.f32.mrb[0].mxu0
        %v1749 = vadd.f32 0.0, %v1748
        %v1750 = vpop.f32.mrb[0].mxu0
        %1751 = vdwg.mxu0
        %v1752 = vadd.f32 %v1498, %v1744
        %v1753 = vadd.f32 %v1499, %v1749
        %s1754 = scalar_lea.vmem %s1, 96
        %v1755 = vld [vmem:[%s1754] sm:$0xff]
        %v1756 = vld [vmem:[%s1754 + $0x8] sm:$0xff]
        %s1757 = scalar_lea.vmem %s2, 96
        %v1758 = vld [vmem:[%s1757] sm:$0xff]
        %v1759 = vld [vmem:[%s1757 + $0x8] sm:$0xff]
        %v1761 = vsel %vm240, %v1758, 0
        %v1764 = vsel %vm240, %v1759, 0
        %1766 = vmatprep.subr.mxu0 0.0
        %1767 = vmatpush1.msra.mxu0 %v234
        %1768 = vmatprep.subr.mxu0 0.0
        %1769 = vmatpush1.msra.mxu0 %v235
        %1770 = vmatprep.subr.mxu0 0.0
        %1771 = vmatpush1.msra.mxu0 0.0
        %1772 = vmatprep.subr.mxu0 0.0
        %1773 = vmatpush1.msra.mxu0 0.0
        %1774 = vmatprep.subr.mxu0 0.0
        %1775 = vmatpush1.msra.mxu0 0.0
        %1776 = vmatprep.subr.mxu0 0.0
        %1777 = vmatpush1.msra.mxu0 0.0
        %1778 = vmatprep.subr.mxu0 0.0
        %1779 = vmatpush1.msra.mxu0 0.0
        %1780 = vmatprep.subr.mxu0 0.0
        %1781 = vmatpush1.msra.mxu0 0.0
        %1782 = vmatprep.subr.mxu0 0.0
        %1783 = vmatpush1.msra.mxu0 0.0
        %1784 = vmatprep.subr.mxu0 0.0
        %1785 = vmatpush1.msra.mxu0 0.0
        %1786 = vmatprep.subr.mxu0 0.0
        %1787 = vmatpush1.msra.mxu0 0.0
        %1788 = vmatprep.subr.mxu0 0.0
        %1789 = vmatpush1.msra.mxu0 0.0
        %1790 = vmatprep.subr.mxu0 0.0
        %1791 = vmatpush1.msra.mxu0 0.0
        %1792 = vmatprep.subr.mxu0 0.0
        %1793 = vmatpush1.msra.mxu0 0.0
        %1794 = vmatprep.subr.mxu0 0.0
        %1795 = vmatpush1.msra.mxu0 0.0
        %1796 = vmatprep.subr.mxu0 0.0
        %1797 = vmatpush1.msra.mxu0 0.0
        %1798 = vmatprep.subr.mxu0 0.0
        %1799 = vmatpush1.msra.mxu0 0.0
        %1800 = vmatprep.subr.mxu0 0.0
        %1801 = vmatpush1.msra.mxu0 0.0
        %1802 = vmatprep.subr.mxu0 0.0
        %1803 = vmatpush1.msra.mxu0 0.0
        %1804 = vmatprep.subr.mxu0 0.0
        %1805 = vmatpush1.msra.mxu0 0.0
        %1806 = vmatprep.subr.mxu0 0.0
        %1807 = vmatpush1.msra.mxu0 0.0
        %1808 = vmatprep.subr.mxu0 0.0
        %1809 = vmatpush1.msra.mxu0 0.0
        %1810 = vmatprep.subr.mxu0 0.0
        %1811 = vmatpush1.msra.mxu0 0.0
        %1812 = vmatprep.subr.mxu0 0.0
        %1813 = vmatpush1.msra.mxu0 0.0
        %1814 = vmatprep.subr.mxu0 0.0
        %1815 = vmatpush1.msra.mxu0 0.0
        %1816 = vmatprep.subr.mxu0 0.0
        %1817 = vmatpush1.msra.mxu0 0.0
        %1818 = vmatprep.subr.mxu0 0.0
        %1819 = vmatpush1.msra.mxu0 0.0
        %1820 = vmatprep.subr.mxu0 0.0
        %1821 = vmatpush1.msra.mxu0 0.0
        %1822 = vmatprep.subr.mxu0 0.0
        %1823 = vmatpush1.msra.mxu0 0.0
        %1824 = vmatprep.subr.mxu0 0.0
        %1825 = vmatpush1.msra.mxu0 0.0
        %1826 = vmatprep.subr.mxu0 0.0
        %1827 = vmatpush1.msra.mxu0 0.0
        %1828 = vmatprep.subr.mxu0 0.0
        %1829 = vmatpush1.msra.mxu0 0.0
        %1830 = vmatprep.mubr.f32.mxu0 0.0
        %1831 = vmatmul.mubr.f32.gmra.mrb[0].mxu0 %v1761
        %v1832 = vpop.f32.mrb[0].mxu0
        %v1833 = vadd.f32 0.0, %v1832
        %v1834 = vpop.f32.mrb[0].mxu0
        %1835 = vmatprep.mubr.f32.mxu0 0.0
        %1836 = vmatmul.mubr.f32.gmra.mrb[0].mxu0 %v1764
        %v1837 = vpop.f32.mrb[0].mxu0
        %v1838 = vadd.f32 0.0, %v1837
        %v1839 = vpop.f32.mrb[0].mxu0
        %1840 = vdwg.mxu0
        %v1842 = vsel %vm240, %v1755, 0
        %v1845 = vsel %vm240, %v1756, 0
        %1847 = vmatprep.subr.mxu0 0.0
        %1848 = vmatpush1.msra.mxu0 %v222
        %1849 = vmatprep.subr.mxu0 0.0
        %1850 = vmatpush1.msra.mxu0 %v223
        %1851 = vmatprep.subr.mxu0 0.0
        %1852 = vmatpush1.msra.mxu0 0.0
        %1853 = vmatprep.subr.mxu0 0.0
        %1854 = vmatpush1.msra.mxu0 0.0
        %1855 = vmatprep.subr.mxu0 0.0
        %1856 = vmatpush1.msra.mxu0 0.0
        %1857 = vmatprep.subr.mxu0 0.0
        %1858 = vmatpush1.msra.mxu0 0.0
        %1859 = vmatprep.subr.mxu0 0.0
        %1860 = vmatpush1.msra.mxu0 0.0
        %1861 = vmatprep.subr.mxu0 0.0
        %1862 = vmatpush1.msra.mxu0 0.0
        %1863 = vmatprep.subr.mxu0 0.0
        %1864 = vmatpush1.msra.mxu0 0.0
        %1865 = vmatprep.subr.mxu0 0.0
        %1866 = vmatpush1.msra.mxu0 0.0
        %1867 = vmatprep.subr.mxu0 0.0
        %1868 = vmatpush1.msra.mxu0 0.0
        %1869 = vmatprep.subr.mxu0 0.0
        %1870 = vmatpush1.msra.mxu0 0.0
        %1871 = vmatprep.subr.mxu0 0.0
        %1872 = vmatpush1.msra.mxu0 0.0
        %1873 = vmatprep.subr.mxu0 0.0
        %1874 = vmatpush1.msra.mxu0 0.0
        %1875 = vmatprep.subr.mxu0 0.0
        %1876 = vmatpush1.msra.mxu0 0.0
        %1877 = vmatprep.subr.mxu0 0.0
        %1878 = vmatpush1.msra.mxu0 0.0
        %1879 = vmatprep.subr.mxu0 0.0
        %1880 = vmatpush1.msra.mxu0 0.0
        %1881 = vmatprep.subr.mxu0 0.0
        %1882 = vmatpush1.msra.mxu0 0.0
        %1883 = vmatprep.subr.mxu0 0.0
        %1884 = vmatpush1.msra.mxu0 0.0
        %1885 = vmatprep.subr.mxu0 0.0
        %1886 = vmatpush1.msra.mxu0 0.0
        %1887 = vmatprep.subr.mxu0 0.0
        %1888 = vmatpush1.msra.mxu0 0.0
        %1889 = vmatprep.subr.mxu0 0.0
        %1890 = vmatpush1.msra.mxu0 0.0
        %1891 = vmatprep.subr.mxu0 0.0
        %1892 = vmatpush1.msra.mxu0 0.0
        %1893 = vmatprep.subr.mxu0 0.0
        %1894 = vmatpush1.msra.mxu0 0.0
        %1895 = vmatprep.subr.mxu0 0.0
        %1896 = vmatpush1.msra.mxu0 0.0
        %1897 = vmatprep.subr.mxu0 0.0
        %1898 = vmatpush1.msra.mxu0 0.0
        %1899 = vmatprep.subr.mxu0 0.0
        %1900 = vmatpush1.msra.mxu0 0.0
        %1901 = vmatprep.subr.mxu0 0.0
        %1902 = vmatpush1.msra.mxu0 0.0
        %1903 = vmatprep.subr.mxu0 0.0
        %1904 = vmatpush1.msra.mxu0 0.0
        %1905 = vmatprep.subr.mxu0 0.0
        %1906 = vmatpush1.msra.mxu0 0.0
        %1907 = vmatprep.subr.mxu0 0.0
        %1908 = vmatpush1.msra.mxu0 0.0
        %1909 = vmatprep.subr.mxu0 0.0
        %1910 = vmatpush1.msra.mxu0 0.0
        %1911 = vmatprep.mubr.f32.mxu0 0.0
        %1912 = vmatmul.mubr.f32.gmra.mrb[0].mxu0 %v1842
        %v1913 = vpop.f32.mrb[0].mxu0
        %v1914 = vadd.f32 %v1833, %v1913
        %v1915 = vpop.f32.mrb[0].mxu0
        %1916 = vmatprep.mubr.f32.mxu0 0.0
        %1917 = vmatmul.mubr.f32.gmra.mrb[0].mxu0 %v1845
        %v1918 = vpop.f32.mrb[0].mxu0
        %v1919 = vadd.f32 %v1838, %v1918
        %v1920 = vpop.f32.mrb[0].mxu0
        %1921 = vdwg.mxu0
        %s1922 = scalar_lea.vmem %s3, 96
        %v1923 = vld [vmem:[%s1922] sm:$0xff]
        %v1924 = vld [vmem:[%s1922 + $0x8] sm:$0xff]
        %v1926 = vsel %vm240, %v1914, 0
        %v1929 = vsel %vm240, %v1919, 0
        %1931 = vmatprep.subr.mxu0 0.0
        %1932 = vmatpush1.msra.mxu0 %v1923
        %1933 = vmatprep.subr.mxu0 0.0
        %1934 = vmatpush1.msra.mxu0 %v1924
        %1935 = vmatprep.subr.mxu0 0.0
        %1936 = vmatpush1.msra.mxu0 0.0
        %1937 = vmatprep.subr.mxu0 0.0
        %1938 = vmatpush1.msra.mxu0 0.0
        %1939 = vmatprep.subr.mxu0 0.0
        %1940 = vmatpush1.msra.mxu0 0.0
        %1941 = vmatprep.subr.mxu0 0.0
        %1942 = vmatpush1.msra.mxu0 0.0
        %1943 = vmatprep.subr.mxu0 0.0
        %1944 = vmatpush1.msra.mxu0 0.0
        %1945 = vmatprep.subr.mxu0 0.0
        %1946 = vmatpush1.msra.mxu0 0.0
        %1947 = vmatprep.subr.mxu0 0.0
        %1948 = vmatpush1.msra.mxu0 0.0
        %1949 = vmatprep.subr.mxu0 0.0
        %1950 = vmatpush1.msra.mxu0 0.0
        %1951 = vmatprep.subr.mxu0 0.0
        %1952 = vmatpush1.msra.mxu0 0.0
        %1953 = vmatprep.subr.mxu0 0.0
        %1954 = vmatpush1.msra.mxu0 0.0
        %1955 = vmatprep.subr.mxu0 0.0
        %1956 = vmatpush1.msra.mxu0 0.0
        %1957 = vmatprep.subr.mxu0 0.0
        %1958 = vmatpush1.msra.mxu0 0.0
        %1959 = vmatprep.subr.mxu0 0.0
        %1960 = vmatpush1.msra.mxu0 0.0
        %1961 = vmatprep.subr.mxu0 0.0
        %1962 = vmatpush1.msra.mxu0 0.0
        %1963 = vmatprep.subr.mxu0 0.0
        %1964 = vmatpush1.msra.mxu0 0.0
        %1965 = vmatprep.subr.mxu0 0.0
        %1966 = vmatpush1.msra.mxu0 0.0
        %1967 = vmatprep.subr.mxu0 0.0
        %1968 = vmatpush1.msra.mxu0 0.0
        %1969 = vmatprep.subr.mxu0 0.0
        %1970 = vmatpush1.msra.mxu0 0.0
        %1971 = vmatprep.subr.mxu0 0.0
        %1972 = vmatpush1.msra.mxu0 0.0
        %1973 = vmatprep.subr.mxu0 0.0
        %1974 = vmatpush1.msra.mxu0 0.0
        %1975 = vmatprep.subr.mxu0 0.0
        %1976 = vmatpush1.msra.mxu0 0.0
        %1977 = vmatprep.subr.mxu0 0.0
        %1978 = vmatpush1.msra.mxu0 0.0
        %1979 = vmatprep.subr.mxu0 0.0
        %1980 = vmatpush1.msra.mxu0 0.0
        %1981 = vmatprep.subr.mxu0 0.0
        %1982 = vmatpush1.msra.mxu0 0.0
        %1983 = vmatprep.subr.mxu0 0.0
        %1984 = vmatpush1.msra.mxu0 0.0
        %1985 = vmatprep.subr.mxu0 0.0
        %1986 = vmatpush1.msra.mxu0 0.0
        %1987 = vmatprep.subr.mxu0 0.0
        %1988 = vmatpush1.msra.mxu0 0.0
        %1989 = vmatprep.subr.mxu0 0.0
        %1990 = vmatpush1.msra.mxu0 0.0
        %1991 = vmatprep.subr.mxu0 0.0
        %1992 = vmatpush1.msra.mxu0 0.0
        %1993 = vmatprep.subr.mxu0 0.0
        %1994 = vmatpush1.msra.mxu0 0.0
        %1995 = vmatprep.mubr.f32.mxu0 0.0
        %1996 = vmatmul.mubr.f32.gmra.mrb[0].mxu0 %v1926
        %v1997 = vpop.f32.mrb[0].mxu0
        %v1998 = vadd.f32 0.0, %v1997
        %v1999 = vpop.f32.mrb[0].mxu0
        %2000 = vmatprep.mubr.f32.mxu0 0.0
        %2001 = vmatmul.mubr.f32.gmra.mrb[0].mxu0 %v1929
        %v2002 = vpop.f32.mrb[0].mxu0
        %v2003 = vadd.f32 0.0, %v2002
        %v2004 = vpop.f32.mrb[0].mxu0
        %2005 = vdwg.mxu0
        %v2006 = vadd.f32 %v1752, %v1998
        %v2007 = vadd.f32 %v1753, %v2003
        %v2008 = vxor.u32 %v2006, 2147483648
        %v2009 = vxor.u32 %v2007, 2147483648
        %v2010 = vmul.f32 %v2008, 1.442695
        %v2011 = vpow.pop %v2010
        %v2012 = vmul.f32 %v2009, 1.442695
        %v2013 = vpow.pop %v2012
        %v2014 = vadd.f32 %v2011, 1.0
        %v2015 = vadd.f32 %v2013, 1.0
        %v2016 = vrcp.pop %v2014
        %v2017 = vmul.f32 1.0, %v2016
        %v2018 = vrcp.pop %v2015
        %v2019 = vmul.f32 1.0, %v2018
        %v2020 = vld [vmem:[%s191] sm:$0xff]
        %v2021 = vld [vmem:[%s191 + $0x8] sm:$0xff]
        %v2022 = vld [vmem:[%s191 + $0x10] sm:$0xff]
        %v2023 = vld [vmem:[%s191 + $0x18] sm:$0xff]
        %v2024 = vld [vmem:[%s191 + $0x20] sm:$0xff]
        %v2025 = vld [vmem:[%s191 + $0x28] sm:$0xff]
        %v2026 = vld [vmem:[%s191 + $0x30] sm:$0xff]
        %v2027 = vld [vmem:[%s191 + $0x38] sm:$0xff]
        %v2028 = vld [vmem:[%s191 + $0x40] sm:$0xff]
        %v2029 = vld [vmem:[%s191 + $0x48] sm:$0xff]
        %v2030 = vld [vmem:[%s191 + $0x50] sm:$0xff]
        %v2031 = vld [vmem:[%s191 + $0x58] sm:$0xff]
        %v2032 = vld [vmem:[%s191 + $0x60] sm:$0xff]
        %v2033 = vld [vmem:[%s191 + $0x68] sm:$0xff]
        %v2034 = vld [vmem:[%s191 + $0x70] sm:$0xff]
        %v2035 = vld [vmem:[%s191 + $0x78] sm:$0xff]
        %v2036 = vmul.f32 %v2020, %v2017
        %v2037 = vmul.f32 %v2021, %v2019
        %v2038 = vmul.f32 %v2022, %v2017
        %v2039 = vmul.f32 %v2023, %v2019
        %v2040 = vmul.f32 %v2024, %v2017
        %v2041 = vmul.f32 %v2025, %v2019
        %v2042 = vmul.f32 %v2026, %v2017
        %v2043 = vmul.f32 %v2027, %v2019
        %v2044 = vmul.f32 %v2028, %v2017
        %v2045 = vmul.f32 %v2029, %v2019
        %v2046 = vmul.f32 %v2030, %v2017
        %v2047 = vmul.f32 %v2031, %v2019
        %v2048 = vmul.f32 %v2032, %v2017
        %v2049 = vmul.f32 %v2033, %v2019
        %v2050 = vmul.f32 %v2034, %v2017
        %v2051 = vmul.f32 %v2035, %v2019
        %2052 = vst.msk [vmem:[%s215] sm:$0xff] %vm240, %v2036
        %2053 = vst.msk [vmem:[%s215 + $0x8] sm:$0xff] %vm240, %v2037
        %2054 = vst.msk [vmem:[%s215 + $0x10] sm:$0xff] %vm240, %v2038
        %2055 = vst.msk [vmem:[%s215 + $0x18] sm:$0xff] %vm240, %v2039
        %2056 = vst.msk [vmem:[%s215 + $0x20] sm:$0xff] %vm240, %v2040
        %2057 = vst.msk [vmem:[%s215 + $0x28] sm:$0xff] %vm240, %v2041
        %2058 = vst.msk [vmem:[%s215 + $0x30] sm:$0xff] %vm240, %v2042
        %2059 = vst.msk [vmem:[%s215 + $0x38] sm:$0xff] %vm240, %v2043
        %2060 = vst.msk [vmem:[%s215 + $0x40] sm:$0xff] %vm240, %v2044
        %2061 = vst.msk [vmem:[%s215 + $0x48] sm:$0xff] %vm240, %v2045
        %2062 = vst.msk [vmem:[%s215 + $0x50] sm:$0xff] %vm240, %v2046
        %2063 = vst.msk [vmem:[%s215 + $0x58] sm:$0xff] %vm240, %v2047
        %2064 = vst.msk [vmem:[%s215 + $0x60] sm:$0xff] %vm240, %v2048
        %2065 = vst.msk [vmem:[%s215 + $0x68] sm:$0xff] %vm240, %v2049
        %2066 = vst.msk [vmem:[%s215 + $0x70] sm:$0xff] %vm240, %v2050
        %2067 = vst.msk [vmem:[%s215 + $0x78] sm:$0xff] %vm240, %v2051
        %s2068 = sand.u32 %s118, 1
        %s2069 = scalar_lea.sflag [#allocation4], %s2068
        %s2070 = sand.u32 %s118, 1
        %s2071 = smul.addr %s2070, 128
        %s2072 = scalar_lea.vmem [#allocation5], %s2071
        // Predicated region
        $region48: #{tpu_custom_call.1} parent=35 // pred_check
          %p2073 = pneg %p128
        $region49: #{tpu_custom_call.1} parent=35 // pred_check_branch
          %2075 = sbr.rel (%p2073) target = $region51
        $region50: #{tpu_custom_call.1} parent=35 // pred_region
          %s2077 = ssub.s32 2048, 2048
          %2078 = vsyncadd %s2069, %s2077
          %s2079 = smul.addr %s21, 16
          %s2080 = smul.addr %s2079, 128
          %s2081 = scalar_lea.hbm %s4, %s2080
          %s2082 = sshll.u32 %s2072, 4
          %s2083 = int_to_ptr.vmem [resolvable:$true] %s2082
          %2088 = dma.vmem_to_hbm [thread:$0]  %s2083, 2048, %s2081, %s2069, 128, 128, 8
        $region51: #{tpu_custom_call.1} parent=35 // pred_fallthru
          _
      $region36: #{tpu_custom_call.1} parent=5 // pred_fallthru
        _
      %p2089 = scmp.le.s32.totalorder 2, %s16
      // Predicated region
      $region52: #{tpu_custom_call.1} parent=5 // pred_check
        %p2090 = pneg %p2089
      $region53: #{tpu_custom_call.1} parent=5 // pred_check_branch
        %2092 = sbr.rel (%p2090) target = $region55
      $region54: #{tpu_custom_call.1} parent=5 // pred_region
        %s2093 = ssub.s32 %s16, 2
        // Predicated region
        $region56: #{tpu_custom_call.1} parent=54 // pred_check
          %p2094 = pneg %p134
        $region57: #{tpu_custom_call.1} parent=54 // pred_check_branch
          %2096 = sbr.rel (%p2094) target = $region59
        $region58: #{tpu_custom_call.1} parent=54 // pred_region
          %s2097 = sand.u32 %s119, 1
          %s2098 = scalar_lea.sflag [#allocation4], %s2097
          %s2099 = sand.u32 %s119, 1
          %s2100 = smul.addr %s2099, 128
          %s2101 = scalar_lea.vmem [#allocation5], %s2100
          %2102 = dma.done %s2098, 2048
        $region59: #{tpu_custom_call.1} parent=54 // pred_fallthru
          _
      $region55: #{tpu_custom_call.1} parent=5 // pred_fallthru
        _
    $region6: #{tpu_custom_call.1} parent=1 // loop_footer
      %s20 = sadd.s32 1, %s16
    $region7: #{tpu_custom_call.1} parent=1 // loop_footer_branch
      %15 = sbr.rel target = $region3
    $region8: #{tpu_custom_call.1} parent=1 // loop_exit
      _
    %2103 = vsyncpa [#allocation3], 1
    %s2104 = scalar_lea.sflag [#allocation3], 1
    %2105 = vsyncpa %s2104, 1
    %2106 = vsyncpa [#allocation4], 1
    %s2107 = scalar_lea.sflag [#allocation4], 1
    %2108 = vsyncpa %s2107, 1

</llo_original>
